<compile_context>
chip_gen: v7x
topology: tpu7x:2x2x1
jax: 0.10.0
libtpu: 0.0.40
codegen_flags: <defaults>
</compile_context>

<pallas_src>
import numpy as np
import jax
import jax.numpy as jnp
from jax.experimental import pallas as pl
from jax.experimental.pallas import tpu as pltpu


def _apply_act(y, act):
    if act == "relu":
        return jnp.maximum(y, 0.0)
    if act == "sigmoid":
        # exp on the EUP + approximate reciprocal (also EUP): no VALU divide
        return pl.reciprocal(1.0 + jnp.exp(-y), approx=True)
    return y


def _round_up(x, m):
    return ((x + m - 1) // m) * m


class DLRMNetPallas:
    def __init__(self, m_spa, ln_emb, ln_bot, ln_top,
                 arch_interaction_op="dot", arch_interaction_itself=False,
                 sigmoid_bot=-1, sigmoid_top=-1, loss_threshold=0.0, seed=0,
                 param_dtype=jnp.bfloat16):
        self.arch_interaction_op = arch_interaction_op
        self.arch_interaction_itself = arch_interaction_itself
        self.loss_threshold = loss_threshold
        self.param_dtype = param_dtype
        rng = np.random.RandomState(seed)

        def q(a):  # quantization round-trip so kernel & reference share values
            return np.asarray(jnp.asarray(a, dtype=param_dtype).astype(jnp.float32))

        def create_mlp(ln, sigmoid_layer):
            layers = []
            for i in range(0, ln.size - 1):
                n, m = int(ln[i]), int(ln[i + 1])
                W = rng.normal(0.0, np.sqrt(2.0 / (m + n)),
                               size=(m, n)).astype(np.float32)
                bt = rng.normal(0.0, np.sqrt(1.0 / m), size=m).astype(np.float32)
                act = "sigmoid" if i == sigmoid_layer else "relu"
                layers.append((q(W), bt, act))
            return layers

        def create_emb(m, ln):
            emb_l = []
            for i in range(0, ln.size):
                n = int(ln[i])
                W = rng.uniform(low=-np.sqrt(1.0 / n), high=np.sqrt(1.0 / n),
                                size=(n, m)).astype(np.float32)
                emb_l.append(q(W))
            return emb_l

        # f32 copies (already quantized) for the pure-JAX reference
        self._emb_np = create_emb(m_spa, ln_emb)
        self._bot_np = create_mlp(ln_bot, sigmoid_bot)
        self._top_np = create_mlp(ln_top, sigmoid_top)

        self.m_spa = int(m_spa)
        self.d = int(ln_bot[-1])
        self.n_tables = len(self._emb_np)
        self.ni = 1 + self.n_tables
        self.n_out = int(ln_top[-1])
        self.NP = max(8, _round_up(self.ni, 8))      # sublane-padded interaction rows

        # ---- bottom MLP: pre-transposed bf16 weights, f32 (1, m) biases ----
        self.bot_params, bot_acts = [], []
        for (W, b, act) in self._bot_np:
            self.bot_params += [jnp.asarray(W.T, param_dtype),
                                jnp.asarray(b.reshape(1, -1), jnp.float32)]
            bot_acts.append(act)
        self.bot_acts = tuple(bot_acts)

        # ---- embedding tables: concatenate row-wise so all bags come from a
        #      single counts @ table matmul; pad rows to a multiple of 256 ----
        rows = [t.shape[0] for t in self._emb_np]
        self.row_offsets = [int(x) for x in np.concatenate([[0], np.cumsum(rows)[:-1]])]
        total_rows = int(np.sum(rows))
        self.rows_padded = _round_up(total_rows, 256)
        tbl = np.zeros((self.rows_padded, self.m_spa), np.float32)
        tbl[:total_rows] = np.concatenate(self._emb_np, axis=0)
        self.table_cat = jnp.asarray(tbl, param_dtype)

        # ---- static pair-selection matrices for 'dot', padded to NP rows ----
        offset = 1 if arch_interaction_itself else 0
        pairs = [(i, j) for i in range(self.ni) for j in range(i + offset)]
        self.npairs = len(pairs)
        selL = np.zeros((self.NP, self.npairs), np.float32)
        selR = np.zeros((self.NP, self.npairs), np.float32)
        for p, (i, j) in enumerate(pairs):
            selL[i, p] = 1.0
            selR[j, p] = 1.0
        self.selL = jnp.asarray(selL)
        self.selR = jnp.asarray(selR)

        # ---- top MLP: first layer split per-segment (folds the concat) ----
        if arch_interaction_op == "dot":
            assert self.m_spa == self.d, "dot interaction needs m_spa == ln_bot[-1]"
            seg_sizes = [self.d, self.npairs]
        else:
            seg_sizes = [self.d] + [self.m_spa] * self.n_tables
        W0, b0, act0 = self._top_np[0]
        wT0 = W0.T
        assert wT0.shape[0] == sum(seg_sizes)
        self.top0_params, off = [], 0
        for s in seg_sizes:
            self.top0_params.append(jnp.asarray(wT0[off:off + s], param_dtype))
            off += s
        self.top0_params.append(jnp.asarray(b0.reshape(1, -1), jnp.float32))
        self.top_acts = tuple([act0] + [a for (_, _, a) in self._top_np[1:]])

        # remaining top layers; a final width-1 layer keeps its (1, in) row so
        # it runs as VPU mul + lane-reduce instead of an MXU dot with N=1
        self.top_rest_params, rowvec = [], []
        n_rest = len(self._top_np) - 1
        for li_, (W, b, _a) in enumerate(self._top_np[1:]):
            rv = (li_ == n_rest - 1) and (W.shape[0] == 1)
            rowvec.append(rv)
            self.top_rest_params += [jnp.asarray(W if rv else W.T, param_dtype),
                                     jnp.asarray(b.reshape(1, -1), jnp.float32)]
        self.top_rest_rowvec = tuple(rowvec)

        self._fused_cache = {}

    # ------------------------- fused Pallas kernel --------------------------

    def _build_fused(self, nnz):
        n_tables = self.n_tables
        n_bot = len(self.bot_acts)
        n_top = len(self.top_acts)
        interaction = self.arch_interaction_op
        NP, d = self.NP, self.d
        rows_padded = self.rows_padded
        n_seg = 2 if interaction == "dot" else 1 + n_tables
        bot_acts, top_acts = self.bot_acts, self.top_acts
        rowvec = self.top_rest_rowvec

        def mm(a, w):  # bf16 MXU path, f32 accumulation
            return jnp.dot(a.astype(w.dtype), w, preferred_element_type=jnp.float32)

        def kernel(*refs):
            it = iter(refs)
            idx_ref = next(it)                            # (NP, nnz) int32
            dense_ref = next(it)                          # (1, n_in) f32
            bot = [(next(it), next(it)) for _ in range(n_bot)]
            tbl_ref = next(it)                            # (rows_padded, m) bf16
            if interaction == "dot":
                selL_ref = next(it)
                selR_ref = next(it)
            top0_w = [next(it) for _ in range(n_seg)]
            top0_b = next(it)
            top_rest = [(next(it), next(it)) for _ in range(n_top - 1)]
            o_ref = next(it)

            # ---- bottom MLP (matmul + bias + activation, all fused) ----
            x = dense_ref[...]
            for l, (w_ref, b_ref) in enumerate(bot):
                x = _apply_act(mm(x, w_ref[...]) + b_ref[...], bot_acts[l])

            # ---- EmbeddingBag sums for all tables in ONE matmul ----
            # counts[r, c] = #{i : idx[r, i] == c}; rows 1..n_tables carry the
            # per-table (offset-adjusted) bag indices, other rows are -1.
            lane_iota = jax.lax.broadcasted_iota(jnp.int32, (NP, rows_padded), 1)
            idx = idx_ref[...]
            counts = (lane_iota == idx[:, 0:1]).astype(jnp.float32)
            for i in range(1, nnz):                       # static unroll
                counts = counts + (lane_iota == idx[:, i:i + 1]).astype(jnp.float32)
            tbl = tbl_ref[...]
            bags = jnp.dot(counts.astype(tbl.dtype), tbl,
                           preferred_element_type=jnp.float32)       # (NP, m)

            # ---- feature interaction ----
            if interaction == "dot":
                # T built in-register: row 0 = x, rows 1..n_tables = bags
                sub_iota = jax.lax.broadcasted_iota(jnp.int32, (NP, d), 0)
                T = jnp.where(sub_iota == 0, x, bags)
                Z = jax.lax.dot_general(T, T, (((1,), (1,)), ((), ())),
                                        preferred_element_type=jnp.float32)
                M = jnp.dot(Z, selR_ref[...], preferred_element_type=jnp.float32)
                zflat = jnp.sum(selL_ref[...] * M, axis=0, keepdims=True)
                segs = [x, zflat]
            else:
                segs = [x] + [bags[t + 1:t + 2, :] for t in range(n_tables)]

            # ---- top MLP (first layer uses the pre-split weight) ----
            y = top0_b[...]
            for seg, w_ref in zip(segs, top0_w):
                y = y + mm(seg, w_ref[...])
            y = _apply_act(y, top_acts[0])
            for l, (w_ref, b_ref) in enumerate(top_rest):
                w = w_ref[...]
                if rowvec[l]:
                    # width-1 output: VPU multiply + lane reduction
                    y = jnp.sum(y * w.astype(jnp.float32), axis=-1,
                                keepdims=True) + b_ref[...]
                else:
                    y = mm(y, w) + b_ref[...]
                y = _apply_act(y, top_acts[l + 1])

            o_ref[...] = y.astype(o_ref.dtype)

        n_inputs = (2 + 2 * n_bot + 1
                    + (2 if interaction == "dot" else 0)
                    + (n_seg + 1) + 2 * (n_top - 1))
        in_specs = [pl.BlockSpec(memory_space=pltpu.MemorySpace.VMEM)] * n_inputs

        fused = pl.pallas_call(
            kernel,
            out_shape=jax.ShapeDtypeStruct((1, self.n_out), jnp.float32),
            in_specs=in_specs,
            out_specs=pl.BlockSpec(memory_space=pltpu.MemorySpace.VMEM),
            compiler_params=pltpu.CompilerParams(vmem_limit_bytes=64 * 1024 * 1024),
        )
        return jax.jit(fused)

    # ------------------------------ forward ---------------------------------

    def forward(self, dense_x, lS_i):
        dense2d = jnp.squeeze(jnp.asarray(dense_x, jnp.float32), axis=0)   # (1, n_in)
        nnz = int(np.asarray(jax.eval_shape(lambda a: a, lS_i[0]).shape)[-1])
        assert all(int(np.asarray(jax.eval_shape(lambda a: a, e).shape)[-1]) == nnz
                   for e in lS_i), "all bags must share a static nnz"

        # shift indices into the concatenated table's row space and pad to
        # NP sublane rows (row 0 = the dense/x slot, unused rows = -1)
        idx = jnp.stack([jnp.reshape(jnp.asarray(e), (-1,)).astype(jnp.int32)
                         + jnp.int32(self.row_offsets[t])
                         for t, e in enumerate(lS_i)])                      # (T, nnz)
        pad_top = jnp.full((1, nnz), -1, jnp.int32)
        pad_bot = jnp.full((self.NP - 1 - self.n_tables, nnz), -1, jnp.int32)
        idx_adj = jnp.concatenate([pad_top, idx, pad_bot], axis=0)          # (NP, nnz)

        if nnz not in self._fused_cache:
            self._fused_cache[nnz] = self._build_fused(nnz)
        params = (self.bot_params + [self.table_cat]
                  + ([self.selL, self.selR]
                     if self.arch_interaction_op == "dot" else [])
                  + self.top0_params + self.top_rest_params)
        p = self._fused_cache[nnz](idx_adj, dense2d, *params)
        if 0.0 < self.loss_threshold < 1.0:
            p = jnp.clip(p, self.loss_threshold, 1.0 - self.loss_threshold)
        return p

    # ------------------- pure-JAX reference (torch semantics) ---------------

    def reference_forward(self, dense_x, lS_i):
        x = jnp.squeeze(jnp.asarray(dense_x, jnp.float32), axis=0)
        idxs = [jnp.reshape(jnp.asarray(e), (-1,)) for e in lS_i]
        for (W, b, act) in self._bot_np:
            x = x @ jnp.asarray(W).T + jnp.asarray(b)
            x = jnp.maximum(x, 0.0) if act == "relu" else jax.nn.sigmoid(x)
        ly = [jnp.sum(jnp.asarray(T)[i], axis=0, keepdims=True)
              for T, i in zip(self._emb_np, idxs)]
        if self.arch_interaction_op == "dot":
            bs, d = x.shape
            T = jnp.concatenate([x] + ly, axis=1).reshape(bs, -1, d)
            Z = jnp.einsum("bnd,bmd->bnm", T, T)
            ni = T.shape[1]
            offset = 1 if self.arch_interaction_itself else 0
            li = [i for i in range(ni) for j in range(i + offset)]
            lj = [j for i in range(ni) for j in range(i + offset)]
            zflat = Z[0][jnp.array(li), jnp.array(lj)].reshape(1, -1)
            R = jnp.concatenate([x, zflat], axis=1)
        else:
            R = jnp.concatenate([x] + ly, axis=1)
        y = R
        for (W, b, act) in self._top_np:
            y = y @ jnp.asarray(W).T + jnp.asarray(b)
            y = jnp.maximum(y, 0.0) if act == "relu" else jax.nn.sigmoid(y)
        if 0.0 < self.loss_threshold < 1.0:
            y = jnp.clip(y, self.loss_threshold, 1.0 - self.loss_threshold)
        return y


# ----------------------------------- main ------------------------------------

if __name__ == "__main__":
    m_spa = 32                                  # embedding / bottom-MLP output dim
    ln_emb = np.array([100, 200, 300])          # 3 embedding tables
    ln_bot = np.array([16, 64, 32])             # bottom MLP
    # interaction output width = d + n*(n-1)/2 with n = 1 + num_tables = 4
    ln_top = np.array([32 + (4 * 3) // 2, 64, 1])    # -> [38, 64, 1]

    model = DLRMNetPallas(
        m_spa=m_spa, ln_emb=ln_emb, ln_bot=ln_bot, ln_top=ln_top,
        arch_interaction_op="dot", arch_interaction_itself=False,
        sigmoid_bot=-1, sigmoid_top=ln_top.size - 2, seed=0,
        param_dtype=jnp.bfloat16)

    key = jax.random.PRNGKey(0)
    k_dense, k_idx = jax.random.split(key)
    dense_x = jax.random.normal(k_dense, (1, 1, int(ln_bot[0])), dtype=jnp.float32)

    num_indices = 8
    idx_keys = jax.random.split(k_idx, len(ln_emb))
    lS_i = [jax.random.randint(idx_keys[t], (1, num_indices), 0, int(ln_emb[t]),
                               dtype=jnp.int32)
            for t in range(len(ln_emb))]

    out = jax.block_until_ready(model.forward(dense_x, lS_i))
    ref = jax.block_until_ready(model.reference_forward(dense_x, lS_i))

    assert out.shape == (1, 1) and out.dtype == jnp.float32
    assert bool(jnp.all(jnp.isfinite(out)))
    assert np.allclose(np.asarray(out), np.asarray(ref), rtol=2e-2, atol=2e-2), \
        (np.asarray(out), np.asarray(ref))
    print("KERNEL_OK")
</pallas_src>

<mosaic_0001>
module attributes {stable_mosaic.version = 11 : i64} {
  func.func @kernel(%arg0: memref<8x8xi32, #tpu.memory_space<vmem>>, %arg1: memref<1x16xf32, #tpu.memory_space<vmem>>, %arg2: memref<16x64xbf16, #tpu.memory_space<vmem>>, %arg3: memref<1x64xf32, #tpu.memory_space<vmem>>, %arg4: memref<64x32xbf16, #tpu.memory_space<vmem>>, %arg5: memref<1x32xf32, #tpu.memory_space<vmem>>, %arg6: memref<768x32xbf16, #tpu.memory_space<vmem>>, %arg7: memref<8x6xf32, #tpu.memory_space<vmem>>, %arg8: memref<8x6xf32, #tpu.memory_space<vmem>>, %arg9: memref<32x64xbf16, #tpu.memory_space<vmem>>, %arg10: memref<6x64xbf16, #tpu.memory_space<vmem>>, %arg11: memref<1x64xf32, #tpu.memory_space<vmem>>, %arg12: memref<1x64xbf16, #tpu.memory_space<vmem>>, %arg13: memref<1x1xf32, #tpu.memory_space<vmem>>, %arg14: memref<1x1xf32, #tpu.memory_space<vmem>>) attributes {dimension_semantics = [], scalar_prefetch = 0 : i64, scratch_operands = 0 : i64, tpu.core_type = #tpu.core_type<tc>} {
    %c0 = arith.constant 0 : index
    %c0_0 = arith.constant 0 : index
    %0 = vector.load %arg1[%c0, %c0_0] : memref<1x16xf32, #tpu.memory_space<vmem>>, vector<1x16xf32>
    %c0_1 = arith.constant 0 : index
    %c0_2 = arith.constant 0 : index
    %1 = vector.load %arg2[%c0_1, %c0_2] : memref<16x64xbf16, #tpu.memory_space<vmem>>, vector<16x64xbf16>
    %2 = arith.truncf %0 : vector<1x16xf32> to vector<1x16xbf16>
    %cst = arith.constant dense<0.000000e+00> : vector<1x64xf32>
    %3 = tpu.matmul %2, %1, %cst {dimension_numbers = #tpu.dot_dimension_numbers<[1], [0], [0], [1], [0, 0, 1, 1], [], []>} : vector<1x16xbf16>, vector<16x64xbf16>, vector<1x64xf32> -> vector<1x64xf32>
    %c0_3 = arith.constant 0 : index
    %c0_4 = arith.constant 0 : index
    %4 = vector.load %arg3[%c0_3, %c0_4] : memref<1x64xf32, #tpu.memory_space<vmem>>, vector<1x64xf32>
    %5 = arith.addf %3, %4 : vector<1x64xf32>
    %cst_5 = arith.constant 0.000000e+00 : f32
    %6 = vector.broadcast %cst_5 : f32 to vector<1x64xf32>
    %7 = arith.maximumf %5, %6 : vector<1x64xf32>
    %c0_6 = arith.constant 0 : index
    %c0_7 = arith.constant 0 : index
    %8 = vector.load %arg4[%c0_6, %c0_7] : memref<64x32xbf16, #tpu.memory_space<vmem>>, vector<64x32xbf16>
    %9 = arith.truncf %7 : vector<1x64xf32> to vector<1x64xbf16>
    %cst_8 = arith.constant dense<0.000000e+00> : vector<1x32xf32>
    %10 = tpu.matmul %9, %8, %cst_8 {dimension_numbers = #tpu.dot_dimension_numbers<[1], [0], [0], [1], [0, 0, 1, 1], [], []>} : vector<1x64xbf16>, vector<64x32xbf16>, vector<1x32xf32> -> vector<1x32xf32>
    %c0_9 = arith.constant 0 : index
    %c0_10 = arith.constant 0 : index
    %11 = vector.load %arg5[%c0_9, %c0_10] : memref<1x32xf32, #tpu.memory_space<vmem>>, vector<1x32xf32>
    %12 = arith.addf %10, %11 : vector<1x32xf32>
    %cst_11 = arith.constant 0.000000e+00 : f32
    %13 = vector.broadcast %cst_11 : f32 to vector<1x32xf32>
    %14 = arith.maximumf %12, %13 : vector<1x32xf32>
    %15 = tpu.iota {dimensions = array<i32: 1>} : vector<8x768xi32>
    %c0_12 = arith.constant 0 : index
    %c0_13 = arith.constant 0 : index
    %16 = vector.load %arg0[%c0_12, %c0_13] : memref<8x8xi32, #tpu.memory_space<vmem>>, vector<8x8xi32>
    %17 = vector.extract_strided_slice %16 {offsets = [0, 0], sizes = [8, 1], strides = [1, 1]} : vector<8x8xi32> to vector<8x1xi32>
    %18 = vector.broadcast %17 : vector<8x1xi32> to vector<8x768xi32>
    %19 = arith.cmpi eq, %15, %18 : vector<8x768xi32>
    %20 = arith.extui %19 : vector<8x768xi1> to vector<8x768xi32>
    %21 = arith.sitofp %20 : vector<8x768xi32> to vector<8x768xf32>
    %22 = vector.extract_strided_slice %16 {offsets = [0, 1], sizes = [8, 1], strides = [1, 1]} : vector<8x8xi32> to vector<8x1xi32>
    %23 = vector.broadcast %22 : vector<8x1xi32> to vector<8x768xi32>
    %24 = arith.cmpi eq, %15, %23 : vector<8x768xi32>
    %25 = arith.extui %24 : vector<8x768xi1> to vector<8x768xi32>
    %26 = arith.sitofp %25 : vector<8x768xi32> to vector<8x768xf32>
    %27 = arith.addf %21, %26 : vector<8x768xf32>
    %28 = vector.extract_strided_slice %16 {offsets = [0, 2], sizes = [8, 1], strides = [1, 1]} : vector<8x8xi32> to vector<8x1xi32>
    %29 = vector.broadcast %28 : vector<8x1xi32> to vector<8x768xi32>
    %30 = arith.cmpi eq, %15, %29 : vector<8x768xi32>
    %31 = arith.extui %30 : vector<8x768xi1> to vector<8x768xi32>
    %32 = arith.sitofp %31 : vector<8x768xi32> to vector<8x768xf32>
    %33 = arith.addf %27, %32 : vector<8x768xf32>
    %34 = vector.extract_strided_slice %16 {offsets = [0, 3], sizes = [8, 1], strides = [1, 1]} : vector<8x8xi32> to vector<8x1xi32>
    %35 = vector.broadcast %34 : vector<8x1xi32> to vector<8x768xi32>
    %36 = arith.cmpi eq, %15, %35 : vector<8x768xi32>
    %37 = arith.extui %36 : vector<8x768xi1> to vector<8x768xi32>
    %38 = arith.sitofp %37 : vector<8x768xi32> to vector<8x768xf32>
    %39 = arith.addf %33, %38 : vector<8x768xf32>
    %40 = vector.extract_strided_slice %16 {offsets = [0, 4], sizes = [8, 1], strides = [1, 1]} : vector<8x8xi32> to vector<8x1xi32>
    %41 = vector.broadcast %40 : vector<8x1xi32> to vector<8x768xi32>
    %42 = arith.cmpi eq, %15, %41 : vector<8x768xi32>
    %43 = arith.extui %42 : vector<8x768xi1> to vector<8x768xi32>
    %44 = arith.sitofp %43 : vector<8x768xi32> to vector<8x768xf32>
    %45 = arith.addf %39, %44 : vector<8x768xf32>
    %46 = vector.extract_strided_slice %16 {offsets = [0, 5], sizes = [8, 1], strides = [1, 1]} : vector<8x8xi32> to vector<8x1xi32>
    %47 = vector.broadcast %46 : vector<8x1xi32> to vector<8x768xi32>
    %48 = arith.cmpi eq, %15, %47 : vector<8x768xi32>
    %49 = arith.extui %48 : vector<8x768xi1> to vector<8x768xi32>
    %50 = arith.sitofp %49 : vector<8x768xi32> to vector<8x768xf32>
    %51 = arith.addf %45, %50 : vector<8x768xf32>
    %52 = vector.extract_strided_slice %16 {offsets = [0, 6], sizes = [8, 1], strides = [1, 1]} : vector<8x8xi32> to vector<8x1xi32>
    %53 = vector.broadcast %52 : vector<8x1xi32> to vector<8x768xi32>
    %54 = arith.cmpi eq, %15, %53 : vector<8x768xi32>
    %55 = arith.extui %54 : vector<8x768xi1> to vector<8x768xi32>
    %56 = arith.sitofp %55 : vector<8x768xi32> to vector<8x768xf32>
    %57 = arith.addf %51, %56 : vector<8x768xf32>
    %58 = vector.extract_strided_slice %16 {offsets = [0, 7], sizes = [8, 1], strides = [1, 1]} : vector<8x8xi32> to vector<8x1xi32>
    %59 = vector.broadcast %58 : vector<8x1xi32> to vector<8x768xi32>
    %60 = arith.cmpi eq, %15, %59 : vector<8x768xi32>
    %61 = arith.extui %60 : vector<8x768xi1> to vector<8x768xi32>
    %62 = arith.sitofp %61 : vector<8x768xi32> to vector<8x768xf32>
    %63 = arith.addf %57, %62 : vector<8x768xf32>
    %c0_14 = arith.constant 0 : index
    %c0_15 = arith.constant 0 : index
    %64 = vector.load %arg6[%c0_14, %c0_15] : memref<768x32xbf16, #tpu.memory_space<vmem>>, vector<768x32xbf16>
    %65 = arith.truncf %63 : vector<8x768xf32> to vector<8x768xbf16>
    %cst_16 = arith.constant dense<0.000000e+00> : vector<8x32xf32>
    %66 = tpu.matmul %65, %64, %cst_16 {dimension_numbers = #tpu.dot_dimension_numbers<[1], [0], [0], [1], [0, 0, 1, 1], [], []>} : vector<8x768xbf16>, vector<768x32xbf16>, vector<8x32xf32> -> vector<8x32xf32>
    %67 = tpu.iota {dimensions = array<i32: 0>} : vector<8x32xi32>
    %c0_i32 = arith.constant 0 : i32
    %68 = vector.broadcast %c0_i32 : i32 to vector<8x32xi32>
    %69 = arith.cmpi eq, %67, %68 : vector<8x32xi32>
    %70 = vector.shape_cast %14 : vector<1x32xf32> to vector<1x32xf32>
    %71 = vector.broadcast %70 : vector<1x32xf32> to vector<8x32xf32>
    %72 = arith.select %69, %71, %66 : vector<8x32xi1>, vector<8x32xf32>
    %cst_17 = arith.constant dense<0.000000e+00> : vector<8x8xf32>
    %73 = tpu.matmul %72, %72, %cst_17 {dimension_numbers = #tpu.dot_dimension_numbers<[1], [1], [0], [0], [0, 0, 1, 0], [], []>} : vector<8x32xf32>, vector<8x32xf32>, vector<8x8xf32> -> vector<8x8xf32>
    %c0_18 = arith.constant 0 : index
    %c0_19 = arith.constant 0 : index
    %74 = vector.load %arg8[%c0_18, %c0_19] : memref<8x6xf32, #tpu.memory_space<vmem>>, vector<8x6xf32>
    %cst_20 = arith.constant dense<0.000000e+00> : vector<8x6xf32>
    %75 = tpu.matmul %73, %74, %cst_20 {dimension_numbers = #tpu.dot_dimension_numbers<[1], [0], [0], [1], [0, 0, 1, 1], [], []>} : vector<8x8xf32>, vector<8x6xf32>, vector<8x6xf32> -> vector<8x6xf32>
    %c0_21 = arith.constant 0 : index
    %c0_22 = arith.constant 0 : index
    %76 = vector.load %arg7[%c0_21, %c0_22] : memref<8x6xf32, #tpu.memory_space<vmem>>, vector<8x6xf32>
    %77 = arith.mulf %76, %75 : vector<8x6xf32>
    %cst_23 = arith.constant dense<0.000000e+00> : vector<6xf32>
    %78 = vector.multi_reduction <add>, %77, %cst_23 [0] : vector<8x6xf32> to vector<6xf32>
    %79 = vector.shape_cast %78 : vector<6xf32> to vector<1x6xf32>
    %c0_24 = arith.constant 0 : index
    %c0_25 = arith.constant 0 : index
    %80 = vector.load %arg11[%c0_24, %c0_25] : memref<1x64xf32, #tpu.memory_space<vmem>>, vector<1x64xf32>
    %c0_26 = arith.constant 0 : index
    %c0_27 = arith.constant 0 : index
    %81 = vector.load %arg9[%c0_26, %c0_27] : memref<32x64xbf16, #tpu.memory_space<vmem>>, vector<32x64xbf16>
    %82 = arith.truncf %14 : vector<1x32xf32> to vector<1x32xbf16>
    %cst_28 = arith.constant dense<0.000000e+00> : vector<1x64xf32>
    %83 = tpu.matmul %82, %81, %cst_28 {dimension_numbers = #tpu.dot_dimension_numbers<[1], [0], [0], [1], [0, 0, 1, 1], [], []>} : vector<1x32xbf16>, vector<32x64xbf16>, vector<1x64xf32> -> vector<1x64xf32>
    %84 = arith.addf %80, %83 : vector<1x64xf32>
    %c0_29 = arith.constant 0 : index
    %c0_30 = arith.constant 0 : index
    %85 = vector.load %arg10[%c0_29, %c0_30] : memref<6x64xbf16, #tpu.memory_space<vmem>>, vector<6x64xbf16>
    %86 = arith.truncf %79 : vector<1x6xf32> to vector<1x6xbf16>
    %cst_31 = arith.constant dense<0.000000e+00> : vector<1x64xf32>
    %87 = tpu.matmul %86, %85, %cst_31 {dimension_numbers = #tpu.dot_dimension_numbers<[1], [0], [0], [1], [0, 0, 1, 1], [], []>} : vector<1x6xbf16>, vector<6x64xbf16>, vector<1x64xf32> -> vector<1x64xf32>
    %88 = arith.addf %84, %87 : vector<1x64xf32>
    %cst_32 = arith.constant 0.000000e+00 : f32
    %89 = vector.broadcast %cst_32 : f32 to vector<1x64xf32>
    %90 = arith.maximumf %88, %89 : vector<1x64xf32>
    %c0_33 = arith.constant 0 : index
    %c0_34 = arith.constant 0 : index
    %91 = vector.load %arg12[%c0_33, %c0_34] : memref<1x64xbf16, #tpu.memory_space<vmem>>, vector<1x64xbf16>
    %92 = arith.extf %91 : vector<1x64xbf16> to vector<1x64xf32>
    %93 = arith.mulf %90, %92 : vector<1x64xf32>
    %cst_35 = arith.constant dense<0.000000e+00> : vector<1xf32>
    %94 = vector.multi_reduction <add>, %93, %cst_35 [1] : vector<1x64xf32> to vector<1xf32>
    %95 = vector.shape_cast %94 : vector<1xf32> to vector<1x1xf32>
    %c0_36 = arith.constant 0 : index
    %c0_37 = arith.constant 0 : index
    %96 = vector.load %arg13[%c0_36, %c0_37] : memref<1x1xf32, #tpu.memory_space<vmem>>, vector<1x1xf32>
    %97 = arith.addf %95, %96 : vector<1x1xf32>
    %cst_38 = arith.constant 0.000000e+00 : f32
    %98 = vector.broadcast %cst_38 : f32 to vector<1x1xf32>
    %99 = arith.subf %98, %97 : vector<1x1xf32>
    %100 = math.exp %99 : vector<1x1xf32>
    %cst_39 = arith.constant 1.000000e+00 : f32
    %101 = vector.broadcast %cst_39 : f32 to vector<1x1xf32>
    %102 = arith.addf %101, %100 : vector<1x1xf32>
    %103 = tpu.reciprocal %102 {approx = true} : vector<1x1xf32> -> vector<1x1xf32>
    %c0_40 = arith.constant 0 : index
    %c0_41 = arith.constant 0 : index
    %104 = vector.load %arg14[%c0_40, %c0_41] : memref<1x1xf32, #tpu.memory_space<vmem>>, vector<1x1xf32>
    tpu.vector_store %arg14[%c0_40, %c0_41], %103 {strides = array<i32>} : memref<1x1xf32, #tpu.memory_space<vmem>>, vector<1x1xf32>,
    return
  }
}

</mosaic_0001>

<llo_original>
// kernel: tpu_custom_call.1
$region0: #{tpu_custom_call.1}
  #allocation0 [shape = 'u32[]', space=smem, size = 0x4, offset = 0x4, fixed_abs, tag = 'smem constant byte address 0x4 - core index']
  #allocation1 [shape = 'u32[144,128]{1,0:T(1,128)}', space=vmem, size = 0x12000, scoped, tag = 'internal scratch']
  #allocation2 [shape = 'f32[1,1]{1,0:T(1,128)S(1)}', space=vmem, size = 0x200, scoped, tag = 'scoped memory for tpu_custom_call.1']
  %s0 = inlined_call_operand.hbm [shape: s32[8,8], index: 0, kind: input, shape index: {}]
  %s1 = inlined_call_operand.hbm [shape: f32[1,16], index: 1, kind: input, shape index: {}]
  %s2 = inlined_call_operand.hbm [shape: bf16[16,64], index: 2, kind: input, shape index: {}]
  %s3 = inlined_call_operand.hbm [shape: f32[1,64], index: 3, kind: input, shape index: {}]
  %s4 = inlined_call_operand.hbm [shape: bf16[64,32], index: 4, kind: input, shape index: {}]
  %s5 = inlined_call_operand.hbm [shape: f32[1,32], index: 5, kind: input, shape index: {}]
  %s6 = inlined_call_operand.hbm [shape: bf16[768,32], index: 6, kind: input, shape index: {}]
  %s7 = inlined_call_operand.hbm [shape: f32[8,6], index: 7, kind: input, shape index: {}]
  %s8 = inlined_call_operand.hbm [shape: f32[8,6], index: 8, kind: input, shape index: {}]
  %s9 = inlined_call_operand.hbm [shape: bf16[32,64], index: 9, kind: input, shape index: {}]
  %s10 = inlined_call_operand.hbm [shape: bf16[6,64], index: 10, kind: input, shape index: {}]
  %s11 = inlined_call_operand.hbm [shape: f32[1,64], index: 11, kind: input, shape index: {}]
  %s12 = inlined_call_operand.hbm [shape: bf16[1,64], index: 12, kind: input, shape index: {}]
  %s13 = inlined_call_operand.<no memory space> [shape: f32[1,1], index: 13, kind: input, shape index: {}]
  %s14 = inlined_call_operand.hbm [shape: f32[1,1], index: 14, kind: output, shape index: {}]
  %s15 = sld [smem:[#allocation0]]
  $region118: #{tpu_custom_call.1} parent=0
    _
  %s17 = ssub.s32 1, %s15
  %s18 = scalar_select 0, %s17, %s15
  %v19 = vstv %s13
  %20 = vst [vmem:[#allocation2] sm:$0x1] %v19
  $region1: #{tpu_custom_call.1} parent=0
    #allocation3 [shape = 'u8[4096]{0}', space=vmem, size = 0x1000, scoped, tag = 'input window, operand 0, single buffered']
    #allocation4 [shape = 's32[1]{0}', space=sflag, size = 0x4, scoped, tag = 'scoped memory for tpu_custom_call.1']
    #allocation5 [shape = 's32[1]{0}', space=sflag, size = 0x4, scoped, tag = 'scoped memory for tpu_custom_call.1']
    #allocation6 [shape = 'u8[512]{0}', space=vmem, size = 0x400, scoped, tag = 'input window, operand 1, single buffered']
    #allocation7 [shape = 's32[1]{0}', space=sflag, size = 0x4, scoped, tag = 'scoped memory for tpu_custom_call.1']
    #allocation8 [shape = 'u8[4096]{0}', space=vmem, size = 0x1000, scoped, tag = 'input window, operand 2, single buffered']
    #allocation9 [shape = 'u8[512]{0}', space=vmem, size = 0x400, scoped, tag = 'input window, operand 3, single buffered']
    #allocation10 [shape = 's32[1]{0}', space=sflag, size = 0x4, scoped, tag = 'scoped memory for tpu_custom_call.1']
    #allocation11 [shape = 'u8[16384]{0}', space=vmem, size = 0x4000, scoped, tag = 'input window, operand 4, single buffered']
    #allocation12 [shape = 'u8[512]{0}', space=vmem, size = 0x400, scoped, tag = 'input window, operand 5, single buffered']
    #allocation13 [shape = 's32[1]{0}', space=sflag, size = 0x4, scoped, tag = 'scoped memory for tpu_custom_call.1']
    #allocation14 [shape = 'u8[196608]{0}', space=vmem, size = 0x30000, scoped, tag = 'input window, operand 6, single buffered']
    #allocation15 [shape = 'u8[4096]{0}', space=vmem, size = 0x1000, scoped, tag = 'input window, operand 7, single buffered']
    #allocation16 [shape = 's32[1]{0}', space=sflag, size = 0x4, scoped, tag = 'scoped memory for tpu_custom_call.1']
    #allocation17 [shape = 'u8[4096]{0}', space=vmem, size = 0x1000, scoped, tag = 'input window, operand 8, single buffered']
    #allocation18 [shape = 'u8[8192]{0}', space=vmem, size = 0x2000, scoped, tag = 'input window, operand 9, single buffered']
    #allocation19 [shape = 's32[1]{0}', space=sflag, size = 0x4, scoped, tag = 'scoped memory for tpu_custom_call.1']
    #allocation20 [shape = 'u8[2048]{0}', space=vmem, size = 0x800, scoped, tag = 'input window, operand 10, single buffered']
    #allocation21 [shape = 'u8[512]{0}', space=vmem, size = 0x400, scoped, tag = 'input window, operand 11, single buffered']
    #allocation22 [shape = 's32[1]{0}', space=sflag, size = 0x4, scoped, tag = 'scoped memory for tpu_custom_call.1']
    #allocation23 [shape = 'u8[512]{0}', space=vmem, size = 0x400, scoped, tag = 'input window, operand 12, single buffered']
    #allocation24 [shape = 'u8[512]{0}', space=vmem, size = 0x400, scoped, tag = 'output window, operand 0, single buffered']
    %21 = vsyncpa [#allocation4], 0
    %22 = vsyncpa [#allocation7], 0
    %23 = vsyncpa [#allocation10], 0
    %24 = vsyncpa [#allocation13], 0
    %25 = vsyncpa [#allocation16], 0
    %26 = vsyncpa [#allocation19], 0
    %27 = vsyncpa [#allocation22], 0
    %28 = vsyncpa [#allocation5], 0
    // Predicated region
    $region2: #{tpu_custom_call.1} parent=1 // pred_check
      _
    $region3: #{tpu_custom_call.1} parent=1 // pred_check_branch
      %30 = sbr.rel (0) target = $region5
    $region4: #{tpu_custom_call.1} parent=1 // pred_region
      %s32 = ssub.s32 128, 128
      %33 = vsyncadd [#allocation4], %s32
      %s35 = sshll.u32 [#allocation3], 4
      %s36 = int_to_ptr.vmem [resolvable:$true] %s35
      %38 = dma.hbm_to_vmem [thread:$0]  %s0, 128, %s36, [#allocation4]
    $region5: #{tpu_custom_call.1} parent=1 // pred_fallthru
      _
    // Predicated region
    $region6: #{tpu_custom_call.1} parent=1 // pred_check
      _
    $region7: #{tpu_custom_call.1} parent=1 // pred_check_branch
      %40 = sbr.rel (0) target = $region9
    $region8: #{tpu_custom_call.1} parent=1 // pred_region
      %s42 = ssub.s32 16, 16
      %43 = vsyncadd [#allocation7], %s42
      %s45 = sshll.u32 [#allocation6], 4
      %s46 = int_to_ptr.vmem [resolvable:$true] %s45
      %48 = dma.hbm_to_vmem [thread:$0]  %s1, 16, %s46, [#allocation7]
    $region9: #{tpu_custom_call.1} parent=1 // pred_fallthru
      _
    // Predicated region
    $region10: #{tpu_custom_call.1} parent=1 // pred_check
      _
    $region11: #{tpu_custom_call.1} parent=1 // pred_check_branch
      %50 = sbr.rel (0) target = $region13
    $region12: #{tpu_custom_call.1} parent=1 // pred_region
      %s52 = ssub.s32 128, 128
      %53 = vsyncadd [#allocation7], %s52
      %s54 = sshll.u32 [#allocation8], 4
      %s55 = int_to_ptr.vmem [resolvable:$true] %s54
      %60 = dma.hbm_to_vmem [thread:$0]  %s2, 128, %s55, [#allocation7], 64, 64, 4
    $region13: #{tpu_custom_call.1} parent=1 // pred_fallthru
      _
    // Predicated region
    $region14: #{tpu_custom_call.1} parent=1 // pred_check
      _
    $region15: #{tpu_custom_call.1} parent=1 // pred_check_branch
      %62 = sbr.rel (0) target = $region17
    $region16: #{tpu_custom_call.1} parent=1 // pred_region
      %s64 = ssub.s32 16, 16
      %65 = vsyncadd [#allocation10], %s64
      %s67 = sshll.u32 [#allocation9], 4
      %s68 = int_to_ptr.vmem [resolvable:$true] %s67
      %70 = dma.hbm_to_vmem [thread:$0]  %s3, 16, %s68, [#allocation10]
    $region17: #{tpu_custom_call.1} parent=1 // pred_fallthru
      _
    // Predicated region
    $region18: #{tpu_custom_call.1} parent=1 // pred_check
      _
    $region19: #{tpu_custom_call.1} parent=1 // pred_check_branch
      %72 = sbr.rel (0) target = $region21
    $region20: #{tpu_custom_call.1} parent=1 // pred_region
      %s74 = ssub.s32 512, 512
      %75 = vsyncadd [#allocation10], %s74
      %s76 = sshll.u32 [#allocation11], 4
      %s77 = int_to_ptr.vmem [resolvable:$true] %s76
      %82 = dma.hbm_to_vmem [thread:$0]  %s4, 512, %s77, [#allocation10], 64, 64, 4
    $region21: #{tpu_custom_call.1} parent=1 // pred_fallthru
      _
    // Predicated region
    $region22: #{tpu_custom_call.1} parent=1 // pred_check
      _
    $region23: #{tpu_custom_call.1} parent=1 // pred_check_branch
      %84 = sbr.rel (0) target = $region25
    $region24: #{tpu_custom_call.1} parent=1 // pred_region
      %s86 = ssub.s32 16, 16
      %87 = vsyncadd [#allocation13], %s86
      %s89 = sshll.u32 [#allocation12], 4
      %s90 = int_to_ptr.vmem [resolvable:$true] %s89
      %92 = dma.hbm_to_vmem [thread:$0]  %s5, 16, %s90, [#allocation13]
    $region25: #{tpu_custom_call.1} parent=1 // pred_fallthru
      _
    // Predicated region
    $region26: #{tpu_custom_call.1} parent=1 // pred_check
      _
    $region27: #{tpu_custom_call.1} parent=1 // pred_check_branch
      %94 = sbr.rel (0) target = $region29
    $region28: #{tpu_custom_call.1} parent=1 // pred_region
      %s96 = ssub.s32 6144, 6144
      %97 = vsyncadd [#allocation13], %s96
      %s98 = sshll.u32 [#allocation14], 4
      %s99 = int_to_ptr.vmem [resolvable:$true] %s98
      %104 = dma.hbm_to_vmem [thread:$0]  %s6, 6144, %s99, [#allocation13], 64, 64, 4
    $region29: #{tpu_custom_call.1} parent=1 // pred_fallthru
      _
    // Predicated region
    $region30: #{tpu_custom_call.1} parent=1 // pred_check
      _
    $region31: #{tpu_custom_call.1} parent=1 // pred_check_branch
      %106 = sbr.rel (0) target = $region33
    $region32: #{tpu_custom_call.1} parent=1 // pred_region
      %s108 = ssub.s32 128, 128
      %109 = vsyncadd [#allocation16], %s108
      %s111 = sshll.u32 [#allocation15], 4
      %s112 = int_to_ptr.vmem [resolvable:$true] %s111
      %114 = dma.hbm_to_vmem [thread:$0]  %s7, 128, %s112, [#allocation16]
    $region33: #{tpu_custom_call.1} parent=1 // pred_fallthru
      _
    // Predicated region
    $region34: #{tpu_custom_call.1} parent=1 // pred_check
      _
    $region35: #{tpu_custom_call.1} parent=1 // pred_check_branch
      %116 = sbr.rel (0) target = $region37
    $region36: #{tpu_custom_call.1} parent=1 // pred_region
      %s118 = ssub.s32 128, 128
      %119 = vsyncadd [#allocation16], %s118
      %s121 = sshll.u32 [#allocation17], 4
      %s122 = int_to_ptr.vmem [resolvable:$true] %s121
      %124 = dma.hbm_to_vmem [thread:$0]  %s8, 128, %s122, [#allocation16]
    $region37: #{tpu_custom_call.1} parent=1 // pred_fallthru
      _
    // Predicated region
    $region38: #{tpu_custom_call.1} parent=1 // pred_check
      _
    $region39: #{tpu_custom_call.1} parent=1 // pred_check_branch
      %126 = sbr.rel (0) target = $region41
    $region40: #{tpu_custom_call.1} parent=1 // pred_region
      %s128 = ssub.s32 256, 256
      %129 = vsyncadd [#allocation19], %s128
      %s130 = sshll.u32 [#allocation18], 4
      %s131 = int_to_ptr.vmem [resolvable:$true] %s130
      %136 = dma.hbm_to_vmem [thread:$0]  %s9, 256, %s131, [#allocation19], 64, 64, 4
    $region41: #{tpu_custom_call.1} parent=1 // pred_fallthru
      _
    // Predicated region
    $region42: #{tpu_custom_call.1} parent=1 // pred_check
      _
    $region43: #{tpu_custom_call.1} parent=1 // pred_check_branch
      %138 = sbr.rel (0) target = $region45
    $region44: #{tpu_custom_call.1} parent=1 // pred_region
      %s140 = ssub.s32 64, 64
      %141 = vsyncadd [#allocation19], %s140
      %s143 = sshll.u32 [#allocation20], 4
      %s144 = int_to_ptr.vmem [resolvable:$true] %s143
      %146 = dma.hbm_to_vmem [thread:$0]  %s10, 64, %s144, [#allocation19]
    $region45: #{tpu_custom_call.1} parent=1 // pred_fallthru
      _
    // Predicated region
    $region46: #{tpu_custom_call.1} parent=1 // pred_check
      _
    $region47: #{tpu_custom_call.1} parent=1 // pred_check_branch
      %148 = sbr.rel (0) target = $region49
    $region48: #{tpu_custom_call.1} parent=1 // pred_region
      %s150 = ssub.s32 16, 16
      %151 = vsyncadd [#allocation22], %s150
      %s153 = sshll.u32 [#allocation21], 4
      %s154 = int_to_ptr.vmem [resolvable:$true] %s153
      %156 = dma.hbm_to_vmem [thread:$0]  %s11, 16, %s154, [#allocation22]
    $region49: #{tpu_custom_call.1} parent=1 // pred_fallthru
      _
    // Predicated region
    $region50: #{tpu_custom_call.1} parent=1 // pred_check
      _
    $region51: #{tpu_custom_call.1} parent=1 // pred_check_branch
      %158 = sbr.rel (0) target = $region53
    $region52: #{tpu_custom_call.1} parent=1 // pred_region
      %s160 = ssub.s32 16, 16
      %161 = vsyncadd [#allocation22], %s160
      %s163 = sshll.u32 [#allocation23], 4
      %s164 = int_to_ptr.vmem [resolvable:$true] %s163
      %166 = dma.hbm_to_vmem [thread:$0]  %s12, 16, %s164, [#allocation22]
    $region53: #{tpu_custom_call.1} parent=1 // pred_fallthru
      _
    // Predicated region
    $region54: #{tpu_custom_call.1} parent=1 // pred_check
      _
    $region55: #{tpu_custom_call.1} parent=1 // pred_check_branch
      %168 = sbr.rel (0) target = $region57
    $region56: #{tpu_custom_call.1} parent=1 // pred_region
      _
    $region57: #{tpu_custom_call.1} parent=1 // pred_fallthru
      _
    // Predicated region
    $region58: #{tpu_custom_call.1} parent=1 // pred_check
      _
    $region59: #{tpu_custom_call.1} parent=1 // pred_check_branch
      %170 = sbr.rel (0) target = $region61
    $region60: #{tpu_custom_call.1} parent=1 // pred_region
      %171 = dma.done [#allocation4], 128
    $region61: #{tpu_custom_call.1} parent=1 // pred_fallthru
      _
    // Predicated region
    $region62: #{tpu_custom_call.1} parent=1 // pred_check
      _
    $region63: #{tpu_custom_call.1} parent=1 // pred_check_branch
      %173 = sbr.rel (0) target = $region65
    $region64: #{tpu_custom_call.1} parent=1 // pred_region
      %174 = dma.done [#allocation7], 16
    $region65: #{tpu_custom_call.1} parent=1 // pred_fallthru
      _
    // Predicated region
    $region66: #{tpu_custom_call.1} parent=1 // pred_check
      _
    $region67: #{tpu_custom_call.1} parent=1 // pred_check_branch
      %176 = sbr.rel (0) target = $region69
    $region68: #{tpu_custom_call.1} parent=1 // pred_region
      %177 = dma.done [#allocation7], 128
    $region69: #{tpu_custom_call.1} parent=1 // pred_fallthru
      _
    // Predicated region
    $region70: #{tpu_custom_call.1} parent=1 // pred_check
      _
    $region71: #{tpu_custom_call.1} parent=1 // pred_check_branch
      %179 = sbr.rel (0) target = $region73
    $region72: #{tpu_custom_call.1} parent=1 // pred_region
      %180 = dma.done [#allocation10], 16
    $region73: #{tpu_custom_call.1} parent=1 // pred_fallthru
      _
    // Predicated region
    $region74: #{tpu_custom_call.1} parent=1 // pred_check
      _
    $region75: #{tpu_custom_call.1} parent=1 // pred_check_branch
      %182 = sbr.rel (0) target = $region77
    $region76: #{tpu_custom_call.1} parent=1 // pred_region
      %183 = dma.done [#allocation10], 512
    $region77: #{tpu_custom_call.1} parent=1 // pred_fallthru
      _
    // Predicated region
    $region78: #{tpu_custom_call.1} parent=1 // pred_check
      _
    $region79: #{tpu_custom_call.1} parent=1 // pred_check_branch
      %185 = sbr.rel (0) target = $region81
    $region80: #{tpu_custom_call.1} parent=1 // pred_region
      %186 = dma.done [#allocation13], 16
    $region81: #{tpu_custom_call.1} parent=1 // pred_fallthru
      _
    // Predicated region
    $region82: #{tpu_custom_call.1} parent=1 // pred_check
      _
    $region83: #{tpu_custom_call.1} parent=1 // pred_check_branch
      %188 = sbr.rel (0) target = $region85
    $region84: #{tpu_custom_call.1} parent=1 // pred_region
      %189 = dma.done [#allocation13], 6144
    $region85: #{tpu_custom_call.1} parent=1 // pred_fallthru
      _
    // Predicated region
    $region86: #{tpu_custom_call.1} parent=1 // pred_check
      _
    $region87: #{tpu_custom_call.1} parent=1 // pred_check_branch
      %191 = sbr.rel (0) target = $region89
    $region88: #{tpu_custom_call.1} parent=1 // pred_region
      %192 = dma.done [#allocation16], 128
    $region89: #{tpu_custom_call.1} parent=1 // pred_fallthru
      _
    // Predicated region
    $region90: #{tpu_custom_call.1} parent=1 // pred_check
      _
    $region91: #{tpu_custom_call.1} parent=1 // pred_check_branch
      %194 = sbr.rel (0) target = $region93
    $region92: #{tpu_custom_call.1} parent=1 // pred_region
      %195 = dma.done [#allocation16], 128
    $region93: #{tpu_custom_call.1} parent=1 // pred_fallthru
      _
    // Predicated region
    $region94: #{tpu_custom_call.1} parent=1 // pred_check
      _
    $region95: #{tpu_custom_call.1} parent=1 // pred_check_branch
      %197 = sbr.rel (0) target = $region97
    $region96: #{tpu_custom_call.1} parent=1 // pred_region
      %198 = dma.done [#allocation19], 256
    $region97: #{tpu_custom_call.1} parent=1 // pred_fallthru
      _
    // Predicated region
    $region98: #{tpu_custom_call.1} parent=1 // pred_check
      _
    $region99: #{tpu_custom_call.1} parent=1 // pred_check_branch
      %200 = sbr.rel (0) target = $region101
    $region100: #{tpu_custom_call.1} parent=1 // pred_region
      %201 = dma.done [#allocation19], 64
    $region101: #{tpu_custom_call.1} parent=1 // pred_fallthru
      _
    // Predicated region
    $region102: #{tpu_custom_call.1} parent=1 // pred_check
      _
    $region103: #{tpu_custom_call.1} parent=1 // pred_check_branch
      %203 = sbr.rel (0) target = $region105
    $region104: #{tpu_custom_call.1} parent=1 // pred_region
      %204 = dma.done [#allocation22], 16
    $region105: #{tpu_custom_call.1} parent=1 // pred_fallthru
      _
    // Predicated region
    $region106: #{tpu_custom_call.1} parent=1 // pred_check
      _
    $region107: #{tpu_custom_call.1} parent=1 // pred_check_branch
      %206 = sbr.rel (0) target = $region109
    $region108: #{tpu_custom_call.1} parent=1 // pred_region
      %207 = dma.done [#allocation22], 16
    $region109: #{tpu_custom_call.1} parent=1 // pred_fallthru
      _
    %v209 = vld [vmem:[#allocation6] sm:$0x1]
    %v210 = vld [vmem:[#allocation8] sm:$0xf]
    %v211 = vld [vmem:[#allocation8 + $0x4] sm:$0xf]
    %v212 = vpack.c.bf16 %v209, %v209
    %v213 = vld [vmem:[#allocation9] sm:$0x1]
    %v216 = vunpack.c.l.b16 %v210
    %v217 = vunpack.c.l.b16 %v211
    %v218 = vpack.c.b16 %v217, %v216
    %vm220 = vcmask 130048
    %v222 = vsel %vm220, %v212, 0
    %224 = vmatprep.subr.bf16.mxu0 0
    %225 = vmatpush1.bf16.msra.mxu0 %v218
    %226 = vmatprep.subr.bf16.mxu0 0
    %227 = vmatpush1.bf16.msra.mxu0 0
    %228 = vmatprep.subr.bf16.mxu0 0
    %229 = vmatpush1.bf16.msra.mxu0 0
    %230 = vmatprep.subr.bf16.mxu0 0
    %231 = vmatpush1.bf16.msra.mxu0 0
    %232 = vmatprep.subr.bf16.mxu0 0
    %233 = vmatpush1.bf16.msra.mxu0 0
    %234 = vmatprep.subr.bf16.mxu0 0
    %235 = vmatpush1.bf16.msra.mxu0 0
    %236 = vmatprep.subr.bf16.mxu0 0
    %237 = vmatpush1.bf16.msra.mxu0 0
    %238 = vmatprep.subr.bf16.mxu0 0
    %239 = vmatpush1.bf16.msra.mxu0 0
    %240 = vmatprep.subr.bf16.mxu0 0
    %241 = vmatpush1.bf16.msra.mxu0 0
    %242 = vmatprep.subr.bf16.mxu0 0
    %243 = vmatpush1.bf16.msra.mxu0 0
    %244 = vmatprep.subr.bf16.mxu0 0
    %245 = vmatpush1.bf16.msra.mxu0 0
    %246 = vmatprep.subr.bf16.mxu0 0
    %247 = vmatpush1.bf16.msra.mxu0 0
    %248 = vmatprep.subr.bf16.mxu0 0
    %249 = vmatpush1.bf16.msra.mxu0 0
    %250 = vmatprep.subr.bf16.mxu0 0
    %251 = vmatpush1.bf16.msra.mxu0 0
    %252 = vmatprep.subr.bf16.mxu0 0
    %253 = vmatpush1.bf16.msra.mxu0 0
    %254 = vmatprep.subr.bf16.mxu0 0
    %255 = vmatpush1.bf16.msra.mxu0 0
    %256 = vmatprep.mubr.bf16.mxu0 0
    %257 = vmatmul.mubr.bf16.gmra.mrb[0].mxu0 %v222
    %v258 = vpop.f32.mrb[0].mxu0
    %v259 = vadd.f32 %v213, %v258
    %v260 = vpop.f32.mrb[0].mxu0
    %v261 = vpop.f32.mrb[0].mxu0
    %v262 = vpop.f32.mrb[0].mxu0
    %263 = vdwg.mxu0
    %v264 = vmax.f32 %v259, 0.0
    %v265 = vld [vmem:[#allocation11] sm:$0xf]
    %v266 = vld [vmem:[#allocation11 + $0x4] sm:$0xf]
    %v267 = vld [vmem:[#allocation11 + $0x8] sm:$0xf]
    %v268 = vld [vmem:[#allocation11 + $0xc] sm:$0xf]
    %v269 = vld [vmem:[#allocation11 + $0x10] sm:$0xf]
    %v270 = vld [vmem:[#allocation11 + $0x14] sm:$0xf]
    %v271 = vld [vmem:[#allocation11 + $0x18] sm:$0xf]
    %v272 = vld [vmem:[#allocation11 + $0x1c] sm:$0xf]
    %v273 = vpack.c.bf16 %v264, %v264
    %v274 = vld [vmem:[#allocation12] sm:$0x1]
    %v283 = vunpack.c.l.b16 %v265
    %v284 = vunpack.c.l.b16 %v266
    %v285 = vunpack.c.l.b16 %v267
    %v286 = vunpack.c.l.b16 %v268
    %v287 = vunpack.c.l.b16 %v269
    %v288 = vunpack.c.l.b16 %v270
    %v289 = vunpack.c.l.b16 %v271
    %v290 = vunpack.c.l.b16 %v272
    %v291 = vpack.c.b16 %v284, %v283
    %v292 = vpack.c.b16 %v286, %v285
    %v293 = vpack.c.b16 %v288, %v287
    %v294 = vpack.c.b16 %v290, %v289
    %vm299 = vcmask 523264
    %v301 = vsel %vm299, %v273, 0
    %303 = vmatprep.subr.bf16.mxu0 0
    %304 = vmatpush1.bf16.msra.mxu0 %v291
    %305 = vmatprep.subr.bf16.mxu0 0
    %306 = vmatpush1.bf16.msra.mxu0 %v292
    %307 = vmatprep.subr.bf16.mxu0 0
    %308 = vmatpush1.bf16.msra.mxu0 %v293
    %309 = vmatprep.subr.bf16.mxu0 0
    %310 = vmatpush1.bf16.msra.mxu0 %v294
    %311 = vmatprep.subr.bf16.mxu0 0
    %312 = vmatpush1.bf16.msra.mxu0 0
    %313 = vmatprep.subr.bf16.mxu0 0
    %314 = vmatpush1.bf16.msra.mxu0 0
    %315 = vmatprep.subr.bf16.mxu0 0
    %316 = vmatpush1.bf16.msra.mxu0 0
    %317 = vmatprep.subr.bf16.mxu0 0
    %318 = vmatpush1.bf16.msra.mxu0 0
    %319 = vmatprep.subr.bf16.mxu0 0
    %320 = vmatpush1.bf16.msra.mxu0 0
    %321 = vmatprep.subr.bf16.mxu0 0
    %322 = vmatpush1.bf16.msra.mxu0 0
    %323 = vmatprep.subr.bf16.mxu0 0
    %324 = vmatpush1.bf16.msra.mxu0 0
    %325 = vmatprep.subr.bf16.mxu0 0
    %326 = vmatpush1.bf16.msra.mxu0 0
    %327 = vmatprep.subr.bf16.mxu0 0
    %328 = vmatpush1.bf16.msra.mxu0 0
    %329 = vmatprep.subr.bf16.mxu0 0
    %330 = vmatpush1.bf16.msra.mxu0 0
    %331 = vmatprep.subr.bf16.mxu0 0
    %332 = vmatpush1.bf16.msra.mxu0 0
    %333 = vmatprep.subr.bf16.mxu0 0
    %334 = vmatpush1.bf16.msra.mxu0 0
    %335 = vmatprep.mubr.bf16.mxu0 0
    %336 = vmatmul.mubr.bf16.gmra.mrb[0].mxu0 %v301
    %v337 = vpop.f32.mrb[0].mxu0
    %v338 = vadd.f32 %v274, %v337
    %v339 = vpop.f32.mrb[0].mxu0
    %v340 = vpop.f32.mrb[0].mxu0
    %v341 = vpop.f32.mrb[0].mxu0
    %342 = vdwg.mxu0
    %v343 = vmax.f32 %v338, 0.0
    %v344 = vlaneseq
    %v345 = vand.u32 %v344, 127
    %v346 = vadd.s32 %v345, 128
    %v347 = vadd.s32 %v345, 256
    %v348 = vadd.s32 %v345, 384
    %v349 = vadd.s32 %v345, 512
    %v350 = vadd.s32 %v345, 640
    %v351 = vld [vmem:[#allocation3] sm:$0xff]
    %352 = vset.pattern.permute.xlu0 0
    %353 = vperm.xlu0 %352, %v351
    %v354 = vpop.permute.xlu0 %353
    %vm355 = vcmp.eq.s32.totalorder %v345, %v354
    %vm356 = vcmp.eq.s32.totalorder %v346, %v354
    %vm357 = vcmp.eq.s32.totalorder %v347, %v354
    %vm358 = vcmp.eq.s32.totalorder %v348, %v354
    %vm359 = vcmp.eq.s32.totalorder %v349, %v354
    %vm360 = vcmp.eq.s32.totalorder %v350, %v354
    %v361 = vsel %vm355, 1, 0
    %v362 = vsel %vm356, 1, 0
    %v363 = vsel %vm357, 1, 0
    %v364 = vsel %vm358, 1, 0
    %v365 = vsel %vm359, 1, 0
    %v366 = vsel %vm360, 1, 0
    %v367 = vcvt.s32.f32 %v361
    %v368 = vcvt.s32.f32 %v362
    %v369 = vcvt.s32.f32 %v363
    %v370 = vcvt.s32.f32 %v364
    %v371 = vcvt.s32.f32 %v365
    %v372 = vcvt.s32.f32 %v366
    %373 = vset.pattern.permute.xlu0 1
    %374 = vperm.xlu0 %373, %v351
    %v375 = vpop.permute.xlu0 %374
    %vm376 = vcmp.eq.s32.totalorder %v345, %v375
    %vm377 = vcmp.eq.s32.totalorder %v346, %v375
    %vm378 = vcmp.eq.s32.totalorder %v347, %v375
    %vm379 = vcmp.eq.s32.totalorder %v348, %v375
    %vm380 = vcmp.eq.s32.totalorder %v349, %v375
    %vm381 = vcmp.eq.s32.totalorder %v350, %v375
    %v382 = vsel %vm376, 1, 0
    %v383 = vsel %vm377, 1, 0
    %v384 = vsel %vm378, 1, 0
    %v385 = vsel %vm379, 1, 0
    %v386 = vsel %vm380, 1, 0
    %v387 = vsel %vm381, 1, 0
    %v388 = vcvt.s32.f32 %v382
    %v389 = vcvt.s32.f32 %v383
    %v390 = vcvt.s32.f32 %v384
    %v391 = vcvt.s32.f32 %v385
    %v392 = vcvt.s32.f32 %v386
    %v393 = vcvt.s32.f32 %v387
    %v394 = vadd.f32 %v367, %v388
    %v395 = vadd.f32 %v368, %v389
    %v396 = vadd.f32 %v369, %v390
    %v397 = vadd.f32 %v370, %v391
    %v398 = vadd.f32 %v371, %v392
    %v399 = vadd.f32 %v372, %v393
    %400 = vset.pattern.permute.xlu0 2
    %401 = vperm.xlu0 %400, %v351
    %v402 = vpop.permute.xlu0 %401
    %vm403 = vcmp.eq.s32.totalorder %v345, %v402
    %vm404 = vcmp.eq.s32.totalorder %v346, %v402
    %vm405 = vcmp.eq.s32.totalorder %v347, %v402
    %vm406 = vcmp.eq.s32.totalorder %v348, %v402
    %vm407 = vcmp.eq.s32.totalorder %v349, %v402
    %vm408 = vcmp.eq.s32.totalorder %v350, %v402
    %v409 = vsel %vm403, 1, 0
    %v410 = vsel %vm404, 1, 0
    %v411 = vsel %vm405, 1, 0
    %v412 = vsel %vm406, 1, 0
    %v413 = vsel %vm407, 1, 0
    %v414 = vsel %vm408, 1, 0
    %v415 = vcvt.s32.f32 %v409
    %v416 = vcvt.s32.f32 %v410
    %v417 = vcvt.s32.f32 %v411
    %v418 = vcvt.s32.f32 %v412
    %v419 = vcvt.s32.f32 %v413
    %v420 = vcvt.s32.f32 %v414
    %v421 = vadd.f32 %v394, %v415
    %v422 = vadd.f32 %v395, %v416
    %v423 = vadd.f32 %v396, %v417
    %v424 = vadd.f32 %v397, %v418
    %v425 = vadd.f32 %v398, %v419
    %v426 = vadd.f32 %v399, %v420
    %427 = vset.pattern.permute.xlu0 3
    %428 = vperm.xlu0 %427, %v351
    %v429 = vpop.permute.xlu0 %428
    %vm430 = vcmp.eq.s32.totalorder %v345, %v429
    %vm431 = vcmp.eq.s32.totalorder %v346, %v429
    %vm432 = vcmp.eq.s32.totalorder %v347, %v429
    %vm433 = vcmp.eq.s32.totalorder %v348, %v429
    %vm434 = vcmp.eq.s32.totalorder %v349, %v429
    %vm435 = vcmp.eq.s32.totalorder %v350, %v429
    %v436 = vsel %vm430, 1, 0
    %v437 = vsel %vm431, 1, 0
    %v438 = vsel %vm432, 1, 0
    %v439 = vsel %vm433, 1, 0
    %v440 = vsel %vm434, 1, 0
    %v441 = vsel %vm435, 1, 0
    %v442 = vcvt.s32.f32 %v436
    %v443 = vcvt.s32.f32 %v437
    %v444 = vcvt.s32.f32 %v438
    %v445 = vcvt.s32.f32 %v439
    %v446 = vcvt.s32.f32 %v440
    %v447 = vcvt.s32.f32 %v441
    %v448 = vadd.f32 %v421, %v442
    %v449 = vadd.f32 %v422, %v443
    %v450 = vadd.f32 %v423, %v444
    %v451 = vadd.f32 %v424, %v445
    %v452 = vadd.f32 %v425, %v446
    %v453 = vadd.f32 %v426, %v447
    %454 = vset.pattern.permute.xlu0 4
    %455 = vperm.xlu0 %454, %v351
    %v456 = vpop.permute.xlu0 %455
    %vm457 = vcmp.eq.s32.totalorder %v345, %v456
    %vm458 = vcmp.eq.s32.totalorder %v346, %v456
    %vm459 = vcmp.eq.s32.totalorder %v347, %v456
    %vm460 = vcmp.eq.s32.totalorder %v348, %v456
    %vm461 = vcmp.eq.s32.totalorder %v349, %v456
    %vm462 = vcmp.eq.s32.totalorder %v350, %v456
    %v463 = vsel %vm457, 1, 0
    %v464 = vsel %vm458, 1, 0
    %v465 = vsel %vm459, 1, 0
    %v466 = vsel %vm460, 1, 0
    %v467 = vsel %vm461, 1, 0
    %v468 = vsel %vm462, 1, 0
    %v469 = vcvt.s32.f32 %v463
    %v470 = vcvt.s32.f32 %v464
    %v471 = vcvt.s32.f32 %v465
    %v472 = vcvt.s32.f32 %v466
    %v473 = vcvt.s32.f32 %v467
    %v474 = vcvt.s32.f32 %v468
    %v475 = vadd.f32 %v448, %v469
    %v476 = vadd.f32 %v449, %v470
    %v477 = vadd.f32 %v450, %v471
    %v478 = vadd.f32 %v451, %v472
    %v479 = vadd.f32 %v452, %v473
    %v480 = vadd.f32 %v453, %v474
    %481 = vset.pattern.permute.xlu0 5
    %482 = vperm.xlu0 %481, %v351
    %v483 = vpop.permute.xlu0 %482
    %vm484 = vcmp.eq.s32.totalorder %v345, %v483
    %vm485 = vcmp.eq.s32.totalorder %v346, %v483
    %vm486 = vcmp.eq.s32.totalorder %v347, %v483
    %vm487 = vcmp.eq.s32.totalorder %v348, %v483
    %vm488 = vcmp.eq.s32.totalorder %v349, %v483
    %vm489 = vcmp.eq.s32.totalorder %v350, %v483
    %v490 = vsel %vm484, 1, 0
    %v491 = vsel %vm485, 1, 0
    %v492 = vsel %vm486, 1, 0
    %v493 = vsel %vm487, 1, 0
    %v494 = vsel %vm488, 1, 0
    %v495 = vsel %vm489, 1, 0
    %v496 = vcvt.s32.f32 %v490
    %v497 = vcvt.s32.f32 %v491
    %v498 = vcvt.s32.f32 %v492
    %v499 = vcvt.s32.f32 %v493
    %v500 = vcvt.s32.f32 %v494
    %v501 = vcvt.s32.f32 %v495
    %v502 = vadd.f32 %v475, %v496
    %v503 = vadd.f32 %v476, %v497
    %v504 = vadd.f32 %v477, %v498
    %v505 = vadd.f32 %v478, %v499
    %v506 = vadd.f32 %v479, %v500
    %v507 = vadd.f32 %v480, %v501
    %508 = vset.pattern.permute.xlu0 6
    %509 = vperm.xlu0 %508, %v351
    %v510 = vpop.permute.xlu0 %509
    %vm511 = vcmp.eq.s32.totalorder %v345, %v510
    %vm512 = vcmp.eq.s32.totalorder %v346, %v510
    %vm513 = vcmp.eq.s32.totalorder %v347, %v510
    %vm514 = vcmp.eq.s32.totalorder %v348, %v510
    %vm515 = vcmp.eq.s32.totalorder %v349, %v510
    %vm516 = vcmp.eq.s32.totalorder %v350, %v510
    %v517 = vsel %vm511, 1, 0
    %v518 = vsel %vm512, 1, 0
    %v519 = vsel %vm513, 1, 0
    %v520 = vsel %vm514, 1, 0
    %v521 = vsel %vm515, 1, 0
    %v522 = vsel %vm516, 1, 0
    %v523 = vcvt.s32.f32 %v517
    %v524 = vcvt.s32.f32 %v518
    %v525 = vcvt.s32.f32 %v519
    %v526 = vcvt.s32.f32 %v520
    %v527 = vcvt.s32.f32 %v521
    %v528 = vcvt.s32.f32 %v522
    %v529 = vadd.f32 %v502, %v523
    %v530 = vadd.f32 %v503, %v524
    %v531 = vadd.f32 %v504, %v525
    %v532 = vadd.f32 %v505, %v526
    %v533 = vadd.f32 %v506, %v527
    %v534 = vadd.f32 %v507, %v528
    %535 = vset.pattern.permute.xlu0 7
    %536 = vperm.xlu0 %535, %v351
    %v537 = vpop.permute.xlu0 %536
    %vm538 = vcmp.eq.s32.totalorder %v345, %v537
    %vm539 = vcmp.eq.s32.totalorder %v346, %v537
    %vm540 = vcmp.eq.s32.totalorder %v347, %v537
    %vm541 = vcmp.eq.s32.totalorder %v348, %v537
    %vm542 = vcmp.eq.s32.totalorder %v349, %v537
    %vm543 = vcmp.eq.s32.totalorder %v350, %v537
    %v544 = vsel %vm538, 1, 0
    %v545 = vsel %vm539, 1, 0
    %v546 = vsel %vm540, 1, 0
    %v547 = vsel %vm541, 1, 0
    %v548 = vsel %vm542, 1, 0
    %v549 = vsel %vm543, 1, 0
    %v550 = vcvt.s32.f32 %v544
    %v551 = vcvt.s32.f32 %v545
    %v552 = vcvt.s32.f32 %v546
    %v553 = vcvt.s32.f32 %v547
    %v554 = vcvt.s32.f32 %v548
    %v555 = vcvt.s32.f32 %v549
    %v556 = vadd.f32 %v529, %v550
    %v557 = vadd.f32 %v530, %v551
    %v558 = vadd.f32 %v531, %v552
    %v559 = vadd.f32 %v532, %v553
    %v560 = vadd.f32 %v533, %v554
    %v561 = vadd.f32 %v534, %v555
    %v562 = vld [vmem:[#allocation14] sm:$0xf]
    %v563 = vld [vmem:[#allocation14 + $0x4] sm:$0xf]
    %v564 = vld [vmem:[#allocation14 + $0x8] sm:$0xf]
    %v565 = vld [vmem:[#allocation14 + $0xc] sm:$0xf]
    %v566 = vld [vmem:[#allocation14 + $0x10] sm:$0xf]
    %v567 = vld [vmem:[#allocation14 + $0x14] sm:$0xf]
    %v568 = vld [vmem:[#allocation14 + $0x18] sm:$0xf]
    %v569 = vld [vmem:[#allocation14 + $0x1c] sm:$0xf]
    %v570 = vld [vmem:[#allocation14 + $0x20] sm:$0xf]
    %v571 = vld [vmem:[#allocation14 + $0x24] sm:$0xf]
    %v572 = vld [vmem:[#allocation14 + $0x28] sm:$0xf]
    %v573 = vld [vmem:[#allocation14 + $0x2c] sm:$0xf]
    %v574 = vld [vmem:[#allocation14 + $0x30] sm:$0xf]
    %v575 = vld [vmem:[#allocation14 + $0x34] sm:$0xf]
    %v576 = vld [vmem:[#allocation14 + $0x38] sm:$0xf]
    %v577 = vld [vmem:[#allocation14 + $0x3c] sm:$0xf]
    %v578 = vld [vmem:[#allocation14 + $0x40] sm:$0xf]
    %v579 = vld [vmem:[#allocation14 + $0x44] sm:$0xf]
    %v580 = vld [vmem:[#allocation14 + $0x48] sm:$0xf]
    %v581 = vld [vmem:[#allocation14 + $0x4c] sm:$0xf]
    %v582 = vld [vmem:[#allocation14 + $0x50] sm:$0xf]
    %v583 = vld [vmem:[#allocation14 + $0x54] sm:$0xf]
    %v584 = vld [vmem:[#allocation14 + $0x58] sm:$0xf]
    %v585 = vld [vmem:[#allocation14 + $0x5c] sm:$0xf]
    %v586 = vld [vmem:[#allocation14 + $0x60] sm:$0xf]
    %v587 = vld [vmem:[#allocation14 + $0x64] sm:$0xf]
    %v588 = vld [vmem:[#allocation14 + $0x68] sm:$0xf]
    %v589 = vld [vmem:[#allocation14 + $0x6c] sm:$0xf]
    %v590 = vld [vmem:[#allocation14 + $0x70] sm:$0xf]
    %v591 = vld [vmem:[#allocation14 + $0x74] sm:$0xf]
    %v592 = vld [vmem:[#allocation14 + $0x78] sm:$0xf]
    %v593 = vld [vmem:[#allocation14 + $0x7c] sm:$0xf]
    %v594 = vld [vmem:[#allocation14 + $0x80] sm:$0xf]
    %v595 = vld [vmem:[#allocation14 + $0x84] sm:$0xf]
    %v596 = vld [vmem:[#allocation14 + $0x88] sm:$0xf]
    %v597 = vld [vmem:[#allocation14 + $0x8c] sm:$0xf]
    %v598 = vld [vmem:[#allocation14 + $0x90] sm:$0xf]
    %v599 = vld [vmem:[#allocation14 + $0x94] sm:$0xf]
    %v600 = vld [vmem:[#allocation14 + $0x98] sm:$0xf]
    %v601 = vld [vmem:[#allocation14 + $0x9c] sm:$0xf]
    %v602 = vld [vmem:[#allocation14 + $0xa0] sm:$0xf]
    %v603 = vld [vmem:[#allocation14 + $0xa4] sm:$0xf]
    %v604 = vld [vmem:[#allocation14 + $0xa8] sm:$0xf]
    %v605 = vld [vmem:[#allocation14 + $0xac] sm:$0xf]
    %v606 = vld [vmem:[#allocation14 + $0xb0] sm:$0xf]
    %v607 = vld [vmem:[#allocation14 + $0xb4] sm:$0xf]
    %v608 = vld [vmem:[#allocation14 + $0xb8] sm:$0xf]
    %v609 = vld [vmem:[#allocation14 + $0xbc] sm:$0xf]
    %v610 = vld [vmem:[#allocation14 + $0xc0] sm:$0xf]
    %v611 = vld [vmem:[#allocation14 + $0xc4] sm:$0xf]
    %v612 = vld [vmem:[#allocation14 + $0xc8] sm:$0xf]
    %v613 = vld [vmem:[#allocation14 + $0xcc] sm:$0xf]
    %v614 = vld [vmem:[#allocation14 + $0xd0] sm:$0xf]
    %v615 = vld [vmem:[#allocation14 + $0xd4] sm:$0xf]
    %v616 = vld [vmem:[#allocation14 + $0xd8] sm:$0xf]
    %v617 = vld [vmem:[#allocation14 + $0xdc] sm:$0xf]
    %v618 = vld [vmem:[#allocation14 + $0xe0] sm:$0xf]
    %v619 = vld [vmem:[#allocation14 + $0xe4] sm:$0xf]
    %v620 = vld [vmem:[#allocation14 + $0xe8] sm:$0xf]
    %v621 = vld [vmem:[#allocation14 + $0xec] sm:$0xf]
    %v622 = vld [vmem:[#allocation14 + $0xf0] sm:$0xf]
    %v623 = vld [vmem:[#allocation14 + $0xf4] sm:$0xf]
    %v624 = vld [vmem:[#allocation14 + $0xf8] sm:$0xf]
    %v625 = vld [vmem:[#allocation14 + $0xfc] sm:$0xf]
    %v626 = vld [vmem:[#allocation14 + $0x100] sm:$0xf]
    %v627 = vld [vmem:[#allocation14 + $0x104] sm:$0xf]
    %v628 = vld [vmem:[#allocation14 + $0x108] sm:$0xf]
    %v629 = vld [vmem:[#allocation14 + $0x10c] sm:$0xf]
    %v630 = vld [vmem:[#allocation14 + $0x110] sm:$0xf]
    %v631 = vld [vmem:[#allocation14 + $0x114] sm:$0xf]
    %v632 = vld [vmem:[#allocation14 + $0x118] sm:$0xf]
    %v633 = vld [vmem:[#allocation14 + $0x11c] sm:$0xf]
    %v634 = vld [vmem:[#allocation14 + $0x120] sm:$0xf]
    %v635 = vld [vmem:[#allocation14 + $0x124] sm:$0xf]
    %v636 = vld [vmem:[#allocation14 + $0x128] sm:$0xf]
    %v637 = vld [vmem:[#allocation14 + $0x12c] sm:$0xf]
    %v638 = vld [vmem:[#allocation14 + $0x130] sm:$0xf]
    %v639 = vld [vmem:[#allocation14 + $0x134] sm:$0xf]
    %v640 = vld [vmem:[#allocation14 + $0x138] sm:$0xf]
    %v641 = vld [vmem:[#allocation14 + $0x13c] sm:$0xf]
    %v642 = vld [vmem:[#allocation14 + $0x140] sm:$0xf]
    %v643 = vld [vmem:[#allocation14 + $0x144] sm:$0xf]
    %v644 = vld [vmem:[#allocation14 + $0x148] sm:$0xf]
    %v645 = vld [vmem:[#allocation14 + $0x14c] sm:$0xf]
    %v646 = vld [vmem:[#allocation14 + $0x150] sm:$0xf]
    %v647 = vld [vmem:[#allocation14 + $0x154] sm:$0xf]
    %v648 = vld [vmem:[#allocation14 + $0x158] sm:$0xf]
    %v649 = vld [vmem:[#allocation14 + $0x15c] sm:$0xf]
    %v650 = vld [vmem:[#allocation14 + $0x160] sm:$0xf]
    %v651 = vld [vmem:[#allocation14 + $0x164] sm:$0xf]
    %v652 = vld [vmem:[#allocation14 + $0x168] sm:$0xf]
    %v653 = vld [vmem:[#allocation14 + $0x16c] sm:$0xf]
    %v654 = vld [vmem:[#allocation14 + $0x170] sm:$0xf]
    %v655 = vld [vmem:[#allocation14 + $0x174] sm:$0xf]
    %v656 = vld [vmem:[#allocation14 + $0x178] sm:$0xf]
    %v657 = vld [vmem:[#allocation14 + $0x17c] sm:$0xf]
    %v658 = vpack.c.bf16 %v556, %v556
    %v659 = vpack.c.bf16 %v557, %v557
    %v660 = vpack.c.bf16 %v558, %v558
    %v661 = vpack.c.bf16 %v559, %v559
    %v662 = vpack.c.bf16 %v560, %v560
    %v663 = vpack.c.bf16 %v561, %v561
    %v760 = vunpack.c.l.b16 %v562
    %v761 = vunpack.c.l.b16 %v563
    %v762 = vunpack.c.l.b16 %v564
    %v763 = vunpack.c.l.b16 %v565
    %v764 = vunpack.c.l.b16 %v566
    %v765 = vunpack.c.l.b16 %v567
    %v766 = vunpack.c.l.b16 %v568
    %v767 = vunpack.c.l.b16 %v569
    %v768 = vunpack.c.l.b16 %v570
    %v769 = vunpack.c.l.b16 %v571
    %v770 = vunpack.c.l.b16 %v572
    %v771 = vunpack.c.l.b16 %v573
    %v772 = vunpack.c.l.b16 %v574
    %v773 = vunpack.c.l.b16 %v575
    %v774 = vunpack.c.l.b16 %v576
    %v775 = vunpack.c.l.b16 %v577
    %v776 = vunpack.c.l.b16 %v578
    %v777 = vunpack.c.l.b16 %v579
    %v778 = vunpack.c.l.b16 %v580
    %v779 = vunpack.c.l.b16 %v581
    %v780 = vunpack.c.l.b16 %v582
    %v781 = vunpack.c.l.b16 %v583
    %v782 = vunpack.c.l.b16 %v584
    %v783 = vunpack.c.l.b16 %v585
    %v784 = vunpack.c.l.b16 %v586
    %v785 = vunpack.c.l.b16 %v587
    %v786 = vunpack.c.l.b16 %v588
    %v787 = vunpack.c.l.b16 %v589
    %v788 = vunpack.c.l.b16 %v590
    %v789 = vunpack.c.l.b16 %v591
    %v790 = vunpack.c.l.b16 %v592
    %v791 = vunpack.c.l.b16 %v593
    %v792 = vunpack.c.l.b16 %v594
    %v793 = vunpack.c.l.b16 %v595
    %v794 = vunpack.c.l.b16 %v596
    %v795 = vunpack.c.l.b16 %v597
    %v796 = vunpack.c.l.b16 %v598
    %v797 = vunpack.c.l.b16 %v599
    %v798 = vunpack.c.l.b16 %v600
    %v799 = vunpack.c.l.b16 %v601
    %v800 = vunpack.c.l.b16 %v602
    %v801 = vunpack.c.l.b16 %v603
    %v802 = vunpack.c.l.b16 %v604
    %v803 = vunpack.c.l.b16 %v605
    %v804 = vunpack.c.l.b16 %v606
    %v805 = vunpack.c.l.b16 %v607
    %v806 = vunpack.c.l.b16 %v608
    %v807 = vunpack.c.l.b16 %v609
    %v808 = vunpack.c.l.b16 %v610
    %v809 = vunpack.c.l.b16 %v611
    %v810 = vunpack.c.l.b16 %v612
    %v811 = vunpack.c.l.b16 %v613
    %v812 = vunpack.c.l.b16 %v614
    %v813 = vunpack.c.l.b16 %v615
    %v814 = vunpack.c.l.b16 %v616
    %v815 = vunpack.c.l.b16 %v617
    %v816 = vunpack.c.l.b16 %v618
    %v817 = vunpack.c.l.b16 %v619
    %v818 = vunpack.c.l.b16 %v620
    %v819 = vunpack.c.l.b16 %v621
    %v820 = vunpack.c.l.b16 %v622
    %v821 = vunpack.c.l.b16 %v623
    %v822 = vunpack.c.l.b16 %v624
    %v823 = vunpack.c.l.b16 %v625
    %v824 = vunpack.c.l.b16 %v626
    %v825 = vunpack.c.l.b16 %v627
    %v826 = vunpack.c.l.b16 %v628
    %v827 = vunpack.c.l.b16 %v629
    %v828 = vunpack.c.l.b16 %v630
    %v829 = vunpack.c.l.b16 %v631
    %v830 = vunpack.c.l.b16 %v632
    %v831 = vunpack.c.l.b16 %v633
    %v832 = vunpack.c.l.b16 %v634
    %v833 = vunpack.c.l.b16 %v635
    %v834 = vunpack.c.l.b16 %v636
    %v835 = vunpack.c.l.b16 %v637
    %v836 = vunpack.c.l.b16 %v638
    %v837 = vunpack.c.l.b16 %v639
    %v838 = vunpack.c.l.b16 %v640
    %v839 = vunpack.c.l.b16 %v641
    %v840 = vunpack.c.l.b16 %v642
    %v841 = vunpack.c.l.b16 %v643
    %v842 = vunpack.c.l.b16 %v644
    %v843 = vunpack.c.l.b16 %v645
    %v844 = vunpack.c.l.b16 %v646
    %v845 = vunpack.c.l.b16 %v647
    %v846 = vunpack.c.l.b16 %v648
    %v847 = vunpack.c.l.b16 %v649
    %v848 = vunpack.c.l.b16 %v650
    %v849 = vunpack.c.l.b16 %v651
    %v850 = vunpack.c.l.b16 %v652
    %v851 = vunpack.c.l.b16 %v653
    %v852 = vunpack.c.l.b16 %v654
    %v853 = vunpack.c.l.b16 %v655
    %v854 = vunpack.c.l.b16 %v656
    %v855 = vunpack.c.l.b16 %v657
    %v856 = vpack.c.b16 %v761, %v760
    %v857 = vpack.c.b16 %v763, %v762
    %v858 = vpack.c.b16 %v765, %v764
    %v859 = vpack.c.b16 %v767, %v766
    %v860 = vpack.c.b16 %v769, %v768
    %v861 = vpack.c.b16 %v771, %v770
    %v862 = vpack.c.b16 %v773, %v772
    %v863 = vpack.c.b16 %v775, %v774
    %v864 = vpack.c.b16 %v777, %v776
    %v865 = vpack.c.b16 %v779, %v778
    %v866 = vpack.c.b16 %v781, %v780
    %v867 = vpack.c.b16 %v783, %v782
    %v868 = vpack.c.b16 %v785, %v784
    %v869 = vpack.c.b16 %v787, %v786
    %v870 = vpack.c.b16 %v789, %v788
    %v871 = vpack.c.b16 %v791, %v790
    %v872 = vpack.c.b16 %v793, %v792
    %v873 = vpack.c.b16 %v795, %v794
    %v874 = vpack.c.b16 %v797, %v796
    %v875 = vpack.c.b16 %v799, %v798
    %v876 = vpack.c.b16 %v801, %v800
    %v877 = vpack.c.b16 %v803, %v802
    %v878 = vpack.c.b16 %v805, %v804
    %v879 = vpack.c.b16 %v807, %v806
    %v880 = vpack.c.b16 %v809, %v808
    %v881 = vpack.c.b16 %v811, %v810
    %v882 = vpack.c.b16 %v813, %v812
    %v883 = vpack.c.b16 %v815, %v814
    %v884 = vpack.c.b16 %v817, %v816
    %v885 = vpack.c.b16 %v819, %v818
    %v886 = vpack.c.b16 %v821, %v820
    %v887 = vpack.c.b16 %v823, %v822
    %v888 = vpack.c.b16 %v825, %v824
    %v889 = vpack.c.b16 %v827, %v826
    %v890 = vpack.c.b16 %v829, %v828
    %v891 = vpack.c.b16 %v831, %v830
    %v892 = vpack.c.b16 %v833, %v832
    %v893 = vpack.c.b16 %v835, %v834
    %v894 = vpack.c.b16 %v837, %v836
    %v895 = vpack.c.b16 %v839, %v838
    %v896 = vpack.c.b16 %v841, %v840
    %v897 = vpack.c.b16 %v843, %v842
    %v898 = vpack.c.b16 %v845, %v844
    %v899 = vpack.c.b16 %v847, %v846
    %v900 = vpack.c.b16 %v849, %v848
    %v901 = vpack.c.b16 %v851, %v850
    %v902 = vpack.c.b16 %v853, %v852
    %v903 = vpack.c.b16 %v855, %v854
    %952 = vmatprep.subr.bf16.mxu0 0
    %953 = vmatpush1.bf16.msra.mxu0 %v856
    %954 = vmatprep.subr.bf16.mxu0 0
    %955 = vmatpush1.bf16.msra.mxu0 %v857
    %956 = vmatprep.subr.bf16.mxu0 0
    %957 = vmatpush1.bf16.msra.mxu0 %v858
    %958 = vmatprep.subr.bf16.mxu0 0
    %959 = vmatpush1.bf16.msra.mxu0 %v859
    %960 = vmatprep.subr.bf16.mxu0 0
    %961 = vmatpush1.bf16.msra.mxu0 %v860
    %962 = vmatprep.subr.bf16.mxu0 0
    %963 = vmatpush1.bf16.msra.mxu0 %v861
    %964 = vmatprep.subr.bf16.mxu0 0
    %965 = vmatpush1.bf16.msra.mxu0 %v862
    %966 = vmatprep.subr.bf16.mxu0 0
    %967 = vmatpush1.bf16.msra.mxu0 %v863
    %968 = vmatprep.subr.bf16.mxu0 0
    %969 = vmatpush1.bf16.msra.mxu0 %v864
    %970 = vmatprep.subr.bf16.mxu0 0
    %971 = vmatpush1.bf16.msra.mxu0 %v865
    %972 = vmatprep.subr.bf16.mxu0 0
    %973 = vmatpush1.bf16.msra.mxu0 %v866
    %974 = vmatprep.subr.bf16.mxu0 0
    %975 = vmatpush1.bf16.msra.mxu0 %v867
    %976 = vmatprep.subr.bf16.mxu0 0
    %977 = vmatpush1.bf16.msra.mxu0 %v868
    %978 = vmatprep.subr.bf16.mxu0 0
    %979 = vmatpush1.bf16.msra.mxu0 %v869
    %980 = vmatprep.subr.bf16.mxu0 0
    %981 = vmatpush1.bf16.msra.mxu0 %v870
    %982 = vmatprep.subr.bf16.mxu0 0
    %983 = vmatpush1.bf16.msra.mxu0 %v871
    %984 = vmatprep.mubr.bf16.mxu0 %v659
    %985 = vmatmul.mubr.bf16.gmra.mrb[0].mxu0 %v658
    %v986 = vpop.f32.mrb[0].mxu0
    %v987 = vadd.f32 0.0, %v986
    %v988 = vpop.f32.mrb[0].mxu0
    %v989 = vpop.f32.mrb[0].mxu0
    %v990 = vpop.f32.mrb[0].mxu0
    %991 = vdwg.mxu0
    %992 = vmatprep.subr.bf16.mxu0 0
    %993 = vmatpush1.bf16.msra.mxu0 %v872
    %994 = vmatprep.subr.bf16.mxu0 0
    %995 = vmatpush1.bf16.msra.mxu0 %v873
    %996 = vmatprep.subr.bf16.mxu0 0
    %997 = vmatpush1.bf16.msra.mxu0 %v874
    %998 = vmatprep.subr.bf16.mxu0 0
    %999 = vmatpush1.bf16.msra.mxu0 %v875
    %1000 = vmatprep.subr.bf16.mxu0 0
    %1001 = vmatpush1.bf16.msra.mxu0 %v876
    %1002 = vmatprep.subr.bf16.mxu0 0
    %1003 = vmatpush1.bf16.msra.mxu0 %v877
    %1004 = vmatprep.subr.bf16.mxu0 0
    %1005 = vmatpush1.bf16.msra.mxu0 %v878
    %1006 = vmatprep.subr.bf16.mxu0 0
    %1007 = vmatpush1.bf16.msra.mxu0 %v879
    %1008 = vmatprep.subr.bf16.mxu0 0
    %1009 = vmatpush1.bf16.msra.mxu0 %v880
    %1010 = vmatprep.subr.bf16.mxu0 0
    %1011 = vmatpush1.bf16.msra.mxu0 %v881
    %1012 = vmatprep.subr.bf16.mxu0 0
    %1013 = vmatpush1.bf16.msra.mxu0 %v882
    %1014 = vmatprep.subr.bf16.mxu0 0
    %1015 = vmatpush1.bf16.msra.mxu0 %v883
    %1016 = vmatprep.subr.bf16.mxu0 0
    %1017 = vmatpush1.bf16.msra.mxu0 %v884
    %1018 = vmatprep.subr.bf16.mxu0 0
    %1019 = vmatpush1.bf16.msra.mxu0 %v885
    %1020 = vmatprep.subr.bf16.mxu0 0
    %1021 = vmatpush1.bf16.msra.mxu0 %v886
    %1022 = vmatprep.subr.bf16.mxu0 0
    %1023 = vmatpush1.bf16.msra.mxu0 %v887
    %1024 = vmatprep.mubr.bf16.mxu0 %v661
    %1025 = vmatmul.mubr.bf16.gmra.mrb[0].mxu0 %v660
    %v1026 = vpop.f32.mrb[0].mxu0
    %v1027 = vadd.f32 %v987, %v1026
    %v1028 = vpop.f32.mrb[0].mxu0
    %v1029 = vpop.f32.mrb[0].mxu0
    %v1030 = vpop.f32.mrb[0].mxu0
    %1031 = vdwg.mxu0
    %1032 = vmatprep.subr.bf16.mxu0 0
    %1033 = vmatpush1.bf16.msra.mxu0 %v888
    %1034 = vmatprep.subr.bf16.mxu0 0
    %1035 = vmatpush1.bf16.msra.mxu0 %v889
    %1036 = vmatprep.subr.bf16.mxu0 0
    %1037 = vmatpush1.bf16.msra.mxu0 %v890
    %1038 = vmatprep.subr.bf16.mxu0 0
    %1039 = vmatpush1.bf16.msra.mxu0 %v891
    %1040 = vmatprep.subr.bf16.mxu0 0
    %1041 = vmatpush1.bf16.msra.mxu0 %v892
    %1042 = vmatprep.subr.bf16.mxu0 0
    %1043 = vmatpush1.bf16.msra.mxu0 %v893
    %1044 = vmatprep.subr.bf16.mxu0 0
    %1045 = vmatpush1.bf16.msra.mxu0 %v894
    %1046 = vmatprep.subr.bf16.mxu0 0
    %1047 = vmatpush1.bf16.msra.mxu0 %v895
    %1048 = vmatprep.subr.bf16.mxu0 0
    %1049 = vmatpush1.bf16.msra.mxu0 %v896
    %1050 = vmatprep.subr.bf16.mxu0 0
    %1051 = vmatpush1.bf16.msra.mxu0 %v897
    %1052 = vmatprep.subr.bf16.mxu0 0
    %1053 = vmatpush1.bf16.msra.mxu0 %v898
    %1054 = vmatprep.subr.bf16.mxu0 0
    %1055 = vmatpush1.bf16.msra.mxu0 %v899
    %1056 = vmatprep.subr.bf16.mxu0 0
    %1057 = vmatpush1.bf16.msra.mxu0 %v900
    %1058 = vmatprep.subr.bf16.mxu0 0
    %1059 = vmatpush1.bf16.msra.mxu0 %v901
    %1060 = vmatprep.subr.bf16.mxu0 0
    %1061 = vmatpush1.bf16.msra.mxu0 %v902
    %1062 = vmatprep.subr.bf16.mxu0 0
    %1063 = vmatpush1.bf16.msra.mxu0 %v903
    %1064 = vmatprep.mubr.bf16.mxu0 %v663
    %1065 = vmatmul.mubr.bf16.gmra.mrb[0].mxu0 %v662
    %v1066 = vpop.f32.mrb[0].mxu0
    %v1067 = vadd.f32 %v1027, %v1066
    %v1068 = vpop.f32.mrb[0].mxu0
    %v1069 = vpop.f32.mrb[0].mxu0
    %v1070 = vpop.f32.mrb[0].mxu0
    %1071 = vdwg.mxu0
    %v1072 = vlaneseq
    %v1073 = vshrl.u32 %v1072, 7
    %vm1074 = vcmp.eq.s32.totalorder %v1073, 0
    %v1075 = vlaneseq
    %v1076 = vshrl.u32 %v1075, 7
    %v1077 = vsub.s32 0, %v1076
    %v1078 = vrot.slane %v343, %v1077
    %v1079 = vsel %vm1074, %v1078, %v1067
    %vm1080 = vcmask 261120
    %v1082 = vsel %vm1080, %v1079, 0
    %1084 = vmatprep.subr.mxu0 0.0
    %1085 = vmatpush1.xpose.msra.mxu0 %v1082
    %1086 = vmatprep.subr.mxu0 0.0
    %1087 = vmatpush1.xpose.msra.mxu0 0.0
    %1088 = vmatprep.subr.mxu0 0.0
    %1089 = vmatpush1.xpose.msra.mxu0 0.0
    %1090 = vmatprep.subr.mxu0 0.0
    %1091 = vmatpush1.xpose.msra.mxu0 0.0
    %1092 = vmatprep.subr.mxu0 0.0
    %1093 = vmatpush1.xpose.msra.mxu0 0.0
    %1094 = vmatprep.subr.mxu0 0.0
    %1095 = vmatpush1.xpose.msra.mxu0 0.0
    %1096 = vmatprep.subr.mxu0 0.0
    %1097 = vmatpush1.xpose.msra.mxu0 0.0
    %1098 = vmatprep.subr.mxu0 0.0
    %1099 = vmatpush1.xpose.msra.mxu0 0.0
    %1100 = vmatprep.subr.mxu0 0.0
    %1101 = vmatpush1.xpose.msra.mxu0 0.0
    %1102 = vmatprep.subr.mxu0 0.0
    %1103 = vmatpush1.xpose.msra.mxu0 0.0
    %1104 = vmatprep.subr.mxu0 0.0
    %1105 = vmatpush1.xpose.msra.mxu0 0.0
    %1106 = vmatprep.subr.mxu0 0.0
    %1107 = vmatpush1.xpose.msra.mxu0 0.0
    %1108 = vmatprep.subr.mxu0 0.0
    %1109 = vmatpush1.xpose.msra.mxu0 0.0
    %1110 = vmatprep.subr.mxu0 0.0
    %1111 = vmatpush1.xpose.msra.mxu0 0.0
    %1112 = vmatprep.subr.mxu0 0.0
    %1113 = vmatpush1.xpose.msra.mxu0 0.0
    %1114 = vmatprep.subr.mxu0 0.0
    %1115 = vmatpush1.xpose.msra.mxu0 0.0
    %1116 = vmatprep.subr.mxu0 0.0
    %1117 = vmatpush1.xpose.msra.mxu0 0.0
    %1118 = vmatprep.subr.mxu0 0.0
    %1119 = vmatpush1.xpose.msra.mxu0 0.0
    %1120 = vmatprep.subr.mxu0 0.0
    %1121 = vmatpush1.xpose.msra.mxu0 0.0
    %1122 = vmatprep.subr.mxu0 0.0
    %1123 = vmatpush1.xpose.msra.mxu0 0.0
    %1124 = vmatprep.subr.mxu0 0.0
    %1125 = vmatpush1.xpose.msra.mxu0 0.0
    %1126 = vmatprep.subr.mxu0 0.0
    %1127 = vmatpush1.xpose.msra.mxu0 0.0
    %1128 = vmatprep.subr.mxu0 0.0
    %1129 = vmatpush1.xpose.msra.mxu0 0.0
    %1130 = vmatprep.subr.mxu0 0.0
    %1131 = vmatpush1.xpose.msra.mxu0 0.0
    %1132 = vmatprep.subr.mxu0 0.0
    %1133 = vmatpush1.xpose.msra.mxu0 0.0
    %1134 = vmatprep.subr.mxu0 0.0
    %1135 = vmatpush1.xpose.msra.mxu0 0.0
    %1136 = vmatprep.subr.mxu0 0.0
    %1137 = vmatpush1.xpose.msra.mxu0 0.0
    %1138 = vmatprep.subr.mxu0 0.0
    %1139 = vmatpush1.xpose.msra.mxu0 0.0
    %1140 = vmatprep.subr.mxu0 0.0
    %1141 = vmatpush1.xpose.msra.mxu0 0.0
    %1142 = vmatprep.subr.mxu0 0.0
    %1143 = vmatpush1.xpose.msra.mxu0 0.0
    %1144 = vmatprep.subr.mxu0 0.0
    %1145 = vmatpush1.xpose.msra.mxu0 0.0
    %1146 = vmatprep.subr.mxu0 0.0
    %1147 = vmatpush1.xpose.msra.mxu0 0.0
    %1148 = vmatprep.mubr.f32.mxu0 0.0
    %1149 = vmatmul.mubr.f32.gmra.mrb[0].mxu0 %v1082
    %v1150 = vpop.f32.mrb[0].mxu0
    %v1151 = vadd.f32 0.0, %v1150
    %v1152 = vpop.f32.mrb[0].mxu0
    %1153 = vdwg.mxu0
    %v1154 = vld [vmem:[#allocation17] sm:$0xff]
    %vm1155 = vcmask 64512
    %v1157 = vsel %vm1155, %v1151, 0
    %1159 = vmatprep.subr.mxu0 0.0
    %1160 = vmatpush1.msra.mxu0 %v1154
    %1161 = vmatprep.subr.mxu0 0.0
    %1162 = vmatpush1.msra.mxu0 0.0
    %1163 = vmatprep.subr.mxu0 0.0
    %1164 = vmatpush1.msra.mxu0 0.0
    %1165 = vmatprep.subr.mxu0 0.0
    %1166 = vmatpush1.msra.mxu0 0.0
    %1167 = vmatprep.subr.mxu0 0.0
    %1168 = vmatpush1.msra.mxu0 0.0
    %1169 = vmatprep.subr.mxu0 0.0
    %1170 = vmatpush1.msra.mxu0 0.0
    %1171 = vmatprep.subr.mxu0 0.0
    %1172 = vmatpush1.msra.mxu0 0.0
    %1173 = vmatprep.subr.mxu0 0.0
    %1174 = vmatpush1.msra.mxu0 0.0
    %1175 = vmatprep.subr.mxu0 0.0
    %1176 = vmatpush1.msra.mxu0 0.0
    %1177 = vmatprep.subr.mxu0 0.0
    %1178 = vmatpush1.msra.mxu0 0.0
    %1179 = vmatprep.subr.mxu0 0.0
    %1180 = vmatpush1.msra.mxu0 0.0
    %1181 = vmatprep.subr.mxu0 0.0
    %1182 = vmatpush1.msra.mxu0 0.0
    %1183 = vmatprep.subr.mxu0 0.0
    %1184 = vmatpush1.msra.mxu0 0.0
    %1185 = vmatprep.subr.mxu0 0.0
    %1186 = vmatpush1.msra.mxu0 0.0
    %1187 = vmatprep.subr.mxu0 0.0
    %1188 = vmatpush1.msra.mxu0 0.0
    %1189 = vmatprep.subr.mxu0 0.0
    %1190 = vmatpush1.msra.mxu0 0.0
    %1191 = vmatprep.subr.mxu0 0.0
    %1192 = vmatpush1.msra.mxu0 0.0
    %1193 = vmatprep.subr.mxu0 0.0
    %1194 = vmatpush1.msra.mxu0 0.0
    %1195 = vmatprep.subr.mxu0 0.0
    %1196 = vmatpush1.msra.mxu0 0.0
    %1197 = vmatprep.subr.mxu0 0.0
    %1198 = vmatpush1.msra.mxu0 0.0
    %1199 = vmatprep.subr.mxu0 0.0
    %1200 = vmatpush1.msra.mxu0 0.0
    %1201 = vmatprep.subr.mxu0 0.0
    %1202 = vmatpush1.msra.mxu0 0.0
    %1203 = vmatprep.subr.mxu0 0.0
    %1204 = vmatpush1.msra.mxu0 0.0
    %1205 = vmatprep.subr.mxu0 0.0
    %1206 = vmatpush1.msra.mxu0 0.0
    %1207 = vmatprep.subr.mxu0 0.0
    %1208 = vmatpush1.msra.mxu0 0.0
    %1209 = vmatprep.subr.mxu0 0.0
    %1210 = vmatpush1.msra.mxu0 0.0
    %1211 = vmatprep.subr.mxu0 0.0
    %1212 = vmatpush1.msra.mxu0 0.0
    %1213 = vmatprep.subr.mxu0 0.0
    %1214 = vmatpush1.msra.mxu0 0.0
    %1215 = vmatprep.subr.mxu0 0.0
    %1216 = vmatpush1.msra.mxu0 0.0
    %1217 = vmatprep.subr.mxu0 0.0
    %1218 = vmatpush1.msra.mxu0 0.0
    %1219 = vmatprep.subr.mxu0 0.0
    %1220 = vmatpush1.msra.mxu0 0.0
    %1221 = vmatprep.subr.mxu0 0.0
    %1222 = vmatpush1.msra.mxu0 0.0
    %1223 = vmatprep.mubr.f32.mxu0 0.0
    %1224 = vmatmul.mubr.f32.gmra.mrb[0].mxu0 %v1157
    %v1225 = vpop.f32.mrb[0].mxu0
    %v1226 = vadd.f32 0.0, %v1225
    %v1227 = vpop.f32.mrb[0].mxu0
    %1228 = vdwg.mxu0
    %v1229 = vld [vmem:[#allocation15] sm:$0xff]
    %v1230 = vmul.f32 %v1229, %v1226
    %vm1231 = vcmask 48128
    %v1232 = vsel %vm1231, %v1230, 0.0
    %v1233 = vrot.slane %v1232, 4
    %v1234 = vadd.f32 %v1232, %v1233
    %v1235 = vrot.slane %v1234, 2
    %v1236 = vadd.f32 %v1234, %v1235
    %v1237 = vrot.slane %v1236, 1
    %v1238 = vadd.f32 %v1236, %v1237
    %v1239 = vld [vmem:[#allocation21] sm:$0x1]
    %v1240 = vld [vmem:[#allocation18] sm:$0xf]
    %v1241 = vld [vmem:[#allocation18 + $0x4] sm:$0xf]
    %v1242 = vld [vmem:[#allocation18 + $0x8] sm:$0xf]
    %v1243 = vld [vmem:[#allocation18 + $0xc] sm:$0xf]
    %v1244 = vpack.c.bf16 %v343, %v343
    %v1249 = vunpack.c.l.b16 %v1240
    %v1250 = vunpack.c.l.b16 %v1241
    %v1251 = vunpack.c.l.b16 %v1242
    %v1252 = vunpack.c.l.b16 %v1243
    %v1253 = vpack.c.b16 %v1250, %v1249
    %v1254 = vpack.c.b16 %v1252, %v1251
    %v1258 = vsel %vm1080, %v1244, 0
    %1260 = vmatprep.subr.bf16.mxu0 0
    %1261 = vmatpush1.bf16.msra.mxu0 %v1253
    %1262 = vmatprep.subr.bf16.mxu0 0
    %1263 = vmatpush1.bf16.msra.mxu0 %v1254
    %1264 = vmatprep.subr.bf16.mxu0 0
    %1265 = vmatpush1.bf16.msra.mxu0 0
    %1266 = vmatprep.subr.bf16.mxu0 0
    %1267 = vmatpush1.bf16.msra.mxu0 0
    %1268 = vmatprep.subr.bf16.mxu0 0
    %1269 = vmatpush1.bf16.msra.mxu0 0
    %1270 = vmatprep.subr.bf16.mxu0 0
    %1271 = vmatpush1.bf16.msra.mxu0 0
    %1272 = vmatprep.subr.bf16.mxu0 0
    %1273 = vmatpush1.bf16.msra.mxu0 0
    %1274 = vmatprep.subr.bf16.mxu0 0
    %1275 = vmatpush1.bf16.msra.mxu0 0
    %1276 = vmatprep.subr.bf16.mxu0 0
    %1277 = vmatpush1.bf16.msra.mxu0 0
    %1278 = vmatprep.subr.bf16.mxu0 0
    %1279 = vmatpush1.bf16.msra.mxu0 0
    %1280 = vmatprep.subr.bf16.mxu0 0
    %1281 = vmatpush1.bf16.msra.mxu0 0
    %1282 = vmatprep.subr.bf16.mxu0 0
    %1283 = vmatpush1.bf16.msra.mxu0 0
    %1284 = vmatprep.subr.bf16.mxu0 0
    %1285 = vmatpush1.bf16.msra.mxu0 0
    %1286 = vmatprep.subr.bf16.mxu0 0
    %1287 = vmatpush1.bf16.msra.mxu0 0
    %1288 = vmatprep.subr.bf16.mxu0 0
    %1289 = vmatpush1.bf16.msra.mxu0 0
    %1290 = vmatprep.subr.bf16.mxu0 0
    %1291 = vmatpush1.bf16.msra.mxu0 0
    %1292 = vmatprep.mubr.bf16.mxu0 0
    %1293 = vmatmul.mubr.bf16.gmra.mrb[0].mxu0 %v1258
    %v1294 = vpop.f32.mrb[0].mxu0
    %v1295 = vadd.f32 0.0, %v1294
    %v1296 = vpop.f32.mrb[0].mxu0
    %v1297 = vpop.f32.mrb[0].mxu0
    %v1298 = vpop.f32.mrb[0].mxu0
    %1299 = vdwg.mxu0
    %v1300 = vadd.f32 %v1239, %v1295
    %v1301 = vld [vmem:[#allocation20] sm:$0x7]
    %v1302 = vpack.c.bf16 %v1238, %v1238
    %v1304 = vsel %vm1231, %v1302, 0
    %vm1306 = vcmask 1042432
    %v1308 = vsel %vm1306, %v1301, 0
    %1310 = vmatprep.subr.bf16.mxu0 0
    %1311 = vmatpush1.bf16.msra.mxu0 %v1308
    %1312 = vmatprep.subr.bf16.mxu0 0
    %1313 = vmatpush1.bf16.msra.mxu0 0
    %1314 = vmatprep.subr.bf16.mxu0 0
    %1315 = vmatpush1.bf16.msra.mxu0 0
    %1316 = vmatprep.subr.bf16.mxu0 0
    %1317 = vmatpush1.bf16.msra.mxu0 0
    %1318 = vmatprep.subr.bf16.mxu0 0
    %1319 = vmatpush1.bf16.msra.mxu0 0
    %1320 = vmatprep.subr.bf16.mxu0 0
    %1321 = vmatpush1.bf16.msra.mxu0 0
    %1322 = vmatprep.subr.bf16.mxu0 0
    %1323 = vmatpush1.bf16.msra.mxu0 0
    %1324 = vmatprep.subr.bf16.mxu0 0
    %1325 = vmatpush1.bf16.msra.mxu0 0
    %1326 = vmatprep.subr.bf16.mxu0 0
    %1327 = vmatpush1.bf16.msra.mxu0 0
    %1328 = vmatprep.subr.bf16.mxu0 0
    %1329 = vmatpush1.bf16.msra.mxu0 0
    %1330 = vmatprep.subr.bf16.mxu0 0
    %1331 = vmatpush1.bf16.msra.mxu0 0
    %1332 = vmatprep.subr.bf16.mxu0 0
    %1333 = vmatpush1.bf16.msra.mxu0 0
    %1334 = vmatprep.subr.bf16.mxu0 0
    %1335 = vmatpush1.bf16.msra.mxu0 0
    %1336 = vmatprep.subr.bf16.mxu0 0
    %1337 = vmatpush1.bf16.msra.mxu0 0
    %1338 = vmatprep.subr.bf16.mxu0 0
    %1339 = vmatpush1.bf16.msra.mxu0 0
    %1340 = vmatprep.subr.bf16.mxu0 0
    %1341 = vmatpush1.bf16.msra.mxu0 0
    %1342 = vmatprep.mubr.bf16.mxu0 0
    %1343 = vmatmul.mubr.bf16.gmra.mrb[0].mxu0 %v1304
    %v1344 = vpop.f32.mrb[0].mxu0
    %v1345 = vadd.f32 0.0, %v1344
    %v1346 = vpop.f32.mrb[0].mxu0
    %v1347 = vpop.f32.mrb[0].mxu0
    %v1348 = vpop.f32.mrb[0].mxu0
    %1349 = vdwg.mxu0
    %v1350 = vadd.f32 %v1300, %v1345
    %v1351 = vmax.f32 %v1350, 0.0
    %v1352 = vld [vmem:[#allocation23] sm:$0x1]
    %v1353 = vunpack.c.l.bf16 %v1352
    %v1354 = vmul.f32 %v1351, %v1353
    %vm1355 = vcmask 516096
    %v1356 = vsel %vm1355, %v1354, 0.0
    %1357 = vadd.xlane.f32.xlu0 %v1356
    %v1358 = vpop.xlane.xlu0 %1357
    %v1359 = vld [vmem:[#allocation2] sm:$0x1]
    %v1360 = vadd.f32 %v1358, %v1359
    %v1361 = vsub.f32 0.0, %v1360
    %v1362 = vmul.f32 %v1361, 1.442695
    %v1363 = vpow.pop %v1362
    %v1364 = vadd.f32 %v1363, 1.0
    %v1365 = vrcp.pop %v1364
    %vm1366 = vcmask 0
    %1367 = vst.msk [vmem:[#allocation24] sm:$0x1] %vm1366, %v1365
    // Predicated region
    $region110: #{tpu_custom_call.1} parent=1 // pred_check
      _
    $region111: #{tpu_custom_call.1} parent=1 // pred_check_branch
      %1369 = sbr.rel (0) target = $region113
    $region112: #{tpu_custom_call.1} parent=1 // pred_region
      %s1371 = ssub.s32 16, 16
      %1372 = vsyncadd [#allocation5], %s1371
      %s1374 = sshll.u32 [#allocation24], 4
      %s1375 = int_to_ptr.vmem [resolvable:$true] %s1374
      %1377 = dma.vmem_to_hbm [thread:$0]  %s1375, 16, %s14, [#allocation5]
    $region113: #{tpu_custom_call.1} parent=1 // pred_fallthru
      _
    // Predicated region
    $region114: #{tpu_custom_call.1} parent=1 // pred_check
      _
    $region115: #{tpu_custom_call.1} parent=1 // pred_check_branch
      %1379 = sbr.rel (0) target = $region117
    $region116: #{tpu_custom_call.1} parent=1 // pred_region
      %1380 = dma.done [#allocation5], 16
    $region117: #{tpu_custom_call.1} parent=1 // pred_fallthru
      _
    %1381 = vsyncpa [#allocation4], 1
    %1382 = vsyncpa [#allocation7], 1
    %1383 = vsyncpa [#allocation10], 1
    %1384 = vsyncpa [#allocation13], 1
    %1385 = vsyncpa [#allocation16], 1
    %1386 = vsyncpa [#allocation19], 1
    %1387 = vsyncpa [#allocation22], 1
    %1388 = vsyncpa [#allocation5], 1

</llo_original>
